<compile_context>
chip_gen: v7x
topology: tpu7x:2x2x1
jax: 0.10.0
libtpu: 0.0.40
codegen_flags: <defaults>
</compile_context>

<pallas_src>
import functools

import jax
import jax.numpy as jnp
from jax.experimental import pallas as pl
from jax.experimental.pallas import tpu as pltpu

EPS = 1e-5  # PyTorch BatchNorm2d default


# ---------------------------------------------------------------------------
# Kernel
# ---------------------------------------------------------------------------
def resblock_kernel(x_ref, w1_ref, w2_ref, bnp_ref, o_ref, *,
                    img_h, wcout, cout, inv_cnt):
    rows = x_ref.shape[0]
    x = x_ref[...]                                          # (R, W*Cin) f32

    # --- in-kernel constants (no DMA): image-boundary masks + BN fold/expand ---
    row = jax.lax.broadcasted_iota(jnp.int32, (rows, 1), 0)
    m_dn = (row % img_h != 0).astype(jnp.float32)           # row h-1 exists in-image
    m_up = (row % img_h != img_h - 1).astype(jnp.float32)   # row h+1 exists in-image

    fold = (jax.lax.broadcasted_iota(jnp.int32, (wcout, cout), 0) % cout
            == jax.lax.broadcasted_iota(jnp.int32, (wcout, cout), 1)
            ).astype(jnp.float32)                           # (W*Cout, Cout)
    expand = (jax.lax.broadcasted_iota(jnp.int32, (cout, wcout), 1) % cout
              == jax.lax.broadcasted_iota(jnp.int32, (cout, wcout), 0)
              ).astype(jnp.float32)                         # (Cout, W*Cout)

    def vshift(a):
        # roll + boundary mask replaces the old (R,R) shift-matrix matmuls
        dn = pltpu.roll(a, shift=1, axis=0) * m_dn          # row r-1 (0 at image top)
        up = pltpu.roll(a, shift=rows - 1, axis=0) * m_up   # row r+1 (0 at image bottom)
        return dn, up

    def stats(a):                                           # f32 sum / sumsq, stacked
        s1 = jnp.sum(a, axis=0, keepdims=True)
        s2 = jnp.sum(a * a, axis=0, keepdims=True)
        return jnp.concatenate([s1, s2], axis=0)            # (2, W*Cout)

    def scale_shift(folded2, gamma, beta):                  # (2, Cout) -> (1,Cout)x2
        mean = folded2[0:1] * inv_cnt
        var = folded2[1:2] * inv_cnt - mean * mean          # one-pass biased var (f32)
        sc = gamma * jax.lax.rsqrt(var + EPS)
        return sc, beta - mean * sc

    # ---- conv1 (3x3) + fused 1x1 shortcut: kh-in-K, ONE MXU dot ----
    x_dn, x_up = vshift(x)
    lhs1 = jnp.concatenate([x_dn, x, x_up], axis=1).astype(jnp.bfloat16)
    p1 = jnp.dot(lhs1, w1_ref[...], preferred_element_type=jnp.float32)  # (R, 2*W*Cout)
    acc1 = p1[:, :wcout]                                    # conv1 pre-BN
    ysc = p1[:, wcout:]                                     # 1x1 shortcut pre-BN

    # ---- bn1 + relu (batched fold / expand dots) ----
    f1 = jnp.dot(stats(acc1), fold, preferred_element_type=jnp.float32)   # (2, Cout)
    sc1, sh1 = scale_shift(f1, bnp_ref[0:1, :], bnp_ref[1:2, :])
    e1 = jnp.dot(jnp.concatenate([sc1, sh1], axis=0), expand,
                 preferred_element_type=jnp.float32)                       # (2, W*Cout)
    h1 = jnp.maximum(acc1 * e1[0:1] + e1[1:2], 0.0)

    # ---- conv2 (3x3): kh-in-K, ONE MXU dot ----
    h_dn, h_up = vshift(h1)
    lhs2 = jnp.concatenate([h_dn, h1, h_up], axis=1).astype(jnp.bfloat16)
    acc2 = jnp.dot(lhs2, w2_ref[...], preferred_element_type=jnp.float32)  # (R, W*Cout)

    # ---- bn2 + shortcut-BN (stats share one dot) + residual add + relu ----
    f2 = jnp.dot(jnp.concatenate([stats(acc2), stats(ysc)], axis=0), fold,
                 preferred_element_type=jnp.float32)                       # (4, Cout)
    sc2, sh2 = scale_shift(f2[0:2], bnp_ref[2:3, :], bnp_ref[3:4, :])
    scm, shm = scale_shift(f2[2:4], bnp_ref[4:5, :], bnp_ref[5:6, :])
    e2 = jnp.dot(jnp.concatenate([sc2, sh2, scm, shm], axis=0), expand,
                 preferred_element_type=jnp.float32)                       # (4, W*Cout)
    o_ref[...] = jnp.maximum(acc2 * e2[0:1] + e2[1:2]
                             + ysc * e2[2:3] + e2[3:4], 0.0).astype(o_ref.dtype)


# ---------------------------------------------------------------------------
# Wrapper-side weight plumbing (constant-folds under jit; hoist if reused).
# ---------------------------------------------------------------------------
def _banded_3x3_khK(w_hwio, width):
    """(3,3,Cin,Cout) -> (3*W*Cin, W*Cout): kh stacked along K, kw folded into a
    W-band (exact W halo). conv3x3 becomes ONE dot on [dn | x | up] rows."""
    _, _, cin, cout = w_hwio.shape
    blocks = []
    for kh in range(3):
        b = jnp.zeros((width, cin, width, cout), w_hwio.dtype)
        for kw in range(3):
            diag = jnp.eye(width, width, 1 - kw, dtype=w_hwio.dtype)  # [w_in, w_out]
            b = b + diag[:, None, :, None] * w_hwio[kh, kw][None, :, None, :]
        blocks.append(b.reshape(width * cin, width * cout))
    return jnp.concatenate(blocks, axis=0)


def _blockdiag_1x1(wm, width):
    """(Cin,Cout) -> (W*Cin, W*Cout) block-diagonal = 1x1 conv in row layout."""
    cin, cout = wm.shape
    eye = jnp.eye(width, dtype=wm.dtype)
    return (eye[:, None, :, None] * wm[None, :, None, :]).reshape(
        width * cin, width * cout)


def resblock_forward(x_nchw, params):
    """x_nchw: (N, Cin, H, W) float32 (PyTorch layout). Returns (N, Cout, H, W)."""
    w1, g1, b1, w2, g2, b2, wm, gm, bm = params
    n, cin, h, w = x_nchw.shape
    cout = w1.shape[-1]
    assert w1.shape == (3, 3, cin, cout) and w2.shape == (3, 3, cout, cout)
    assert wm.shape == (cin, cout)

    rows, wcin, wcout = n * h, w * cin, w * cout
    # lane-alignment guards: column slice at `wcout` and the output store must
    # land on (8,128) tile boundaries for unmasked vst / copy-free slices.
    assert wcout % 128 == 0, "W*Cout must be a multiple of 128 (lane tile)"
    assert rows % 8 == 0, "N*H must be a multiple of 8 (sublane tile)"

    # layout plumbing: NCHW -> lane-dense (N*H, W*Cin) rows (single XLA transpose)
    x_rows = jnp.transpose(x_nchw, (0, 2, 3, 1)).reshape(rows, wcin)

    # conv1 RHS: [ 3x3 banded | 1x1 shortcut (center kh block only) ], bf16 for MXU
    band1 = _banded_3x3_khK(w1, w)                                  # (3*W*Cin, W*Cout)
    zeros = jnp.zeros((wcin, wcout), jnp.float32)
    sc_col = jnp.concatenate([zeros, _blockdiag_1x1(wm, w), zeros], axis=0)
    wcat1 = jnp.concatenate([band1, sc_col], axis=1).astype(jnp.bfloat16)
    wcat2 = _banded_3x3_khK(w2, w).astype(jnp.bfloat16)             # (3*W*Cout, W*Cout)

    # all six BN vectors in one (6, Cout) array -> one DMA, one vreg tile
    bnp = jnp.stack([g1, b1, g2, b2, gm, bm], axis=0).astype(jnp.float32)

    kernel = functools.partial(resblock_kernel, img_h=h, wcout=wcout, cout=cout,
                               inv_cnt=1.0 / float(n * h * w))
    mk_vmem = lambda: pl.BlockSpec(memory_space=pltpu.MemorySpace.VMEM)

    flops = 2 * rows * (3 * wcin) * (2 * wcout) + 2 * rows * (3 * wcout) * wcout
    bytes_accessed = (x_rows.size * 4 + wcat1.size * 2 + wcat2.size * 2
                      + bnp.size * 4 + rows * wcout * 4)

    out_rows = pl.pallas_call(
        kernel,
        out_shape=jax.ShapeDtypeStruct((rows, wcout), jnp.float32),
        in_specs=[mk_vmem() for _ in range(4)],
        out_specs=mk_vmem(),
        cost_estimate=pl.CostEstimate(flops=flops, transcendentals=3 * cout,
                                      bytes_accessed=bytes_accessed),
    )(x_rows, wcat1, wcat2, bnp)

    return jnp.transpose(out_rows.reshape(n, h, w, cout), (0, 3, 1, 2))


# ------------------------- pure-JAX reference ------------------------------
def _conv_nhwc(x, w, pad):
    return jax.lax.conv_general_dilated(
        x, w, window_strides=(1, 1), padding=[(pad, pad), (pad, pad)],
        dimension_numbers=('NHWC', 'HWIO', 'NHWC'))


def _bn_train(x, g, b):
    m = jnp.mean(x, axis=(0, 1, 2), keepdims=True)
    v = jnp.mean((x - m) ** 2, axis=(0, 1, 2), keepdims=True)
    return (x - m) * jax.lax.rsqrt(v + EPS) * g.reshape(1, 1, 1, -1) \
        + b.reshape(1, 1, 1, -1)


def resblock_reference(x_nchw, params):
    w1, g1, b1, w2, g2, b2, wm, gm, bm = params
    x = jnp.transpose(x_nchw, (0, 2, 3, 1))
    y = _bn_train(_conv_nhwc(x, wm.reshape(1, 1, *wm.shape), pad=0), gm, bm)
    out = jax.nn.relu(_bn_train(_conv_nhwc(x, w1, pad=1), g1, b1))
    out = _bn_train(_conv_nhwc(out, w2, pad=1), g2, b2)
    out = jax.nn.relu(out + y)
    return jnp.transpose(out, (0, 3, 1, 2))


if __name__ == "__main__":
    N, Cin, Cout, H, W = 2, 4, 8, 16, 16
    key = jax.random.PRNGKey(0)
    ks = jax.random.split(key, 10)

    # deterministic synthetic parameters (shapes implied by ResBlock(4, 8))
    x = jax.random.normal(ks[0], (N, Cin, H, W), jnp.float32)       # NCHW input
    w1 = jax.random.normal(ks[1], (3, 3, Cin, Cout), jnp.float32) * 0.2
    w2 = jax.random.normal(ks[2], (3, 3, Cout, Cout), jnp.float32) * 0.2
    wm = jax.random.normal(ks[3], (Cin, Cout), jnp.float32) * 0.2   # 1x1 mapping
    g1 = 1.0 + 0.1 * jax.random.normal(ks[4], (Cout,), jnp.float32)
    b1 = 0.1 * jax.random.normal(ks[5], (Cout,), jnp.float32)
    g2 = 1.0 + 0.1 * jax.random.normal(ks[6], (Cout,), jnp.float32)
    b2 = 0.1 * jax.random.normal(ks[7], (Cout,), jnp.float32)
    gm = 1.0 + 0.1 * jax.random.normal(ks[8], (Cout,), jnp.float32)
    bm = 0.1 * jax.random.normal(ks[9], (Cout,), jnp.float32)
    params = (w1, g1, b1, w2, g2, b2, wm, gm, bm)

    out = resblock_forward(x, params)
    out = jax.block_until_ready(out)

    ref = resblock_reference(x, params)
    assert out.shape == (N, Cout, H, W), out.shape
    max_err = float(jnp.max(jnp.abs(out - ref)))
    # bf16 MXU operands (f32 accumulation / BN math) -> bf16-appropriate tolerance
    assert jnp.allclose(out, ref, atol=6e-2, rtol=6e-2), f"max abs err {max_err}"

    print("KERNEL_OK")
</pallas_src>

<mosaic_0001>
module attributes {stable_mosaic.version = 11 : i64} {
  func.func @resblock_kernel(%arg0: memref<32x64xf32, #tpu.memory_space<vmem>>, %arg1: memref<192x256xbf16, #tpu.memory_space<vmem>>, %arg2: memref<384x128xbf16, #tpu.memory_space<vmem>>, %arg3: memref<6x8xf32, #tpu.memory_space<vmem>>, %arg4: memref<32x128xf32, #tpu.memory_space<vmem>>) attributes {dimension_semantics = [], scalar_prefetch = 0 : i64, scratch_operands = 0 : i64, tpu.core_type = #tpu.core_type<tc>} {
    %c0 = arith.constant 0 : index
    %c0_0 = arith.constant 0 : index
    %0 = vector.load %arg0[%c0, %c0_0] : memref<32x64xf32, #tpu.memory_space<vmem>>, vector<32x64xf32>
    %1 = tpu.iota {dimensions = array<i32: 0>} : vector<32x1xi32>
    %c16_i32 = arith.constant 16 : i32
    %c0_i32 = arith.constant 0 : i32
    %2 = arith.cmpi eq, %c16_i32, %c0_i32 : i32
    %c1_i32 = arith.constant 1 : i32
    %3 = arith.select %2, %c1_i32, %c16_i32 : i32
    %4 = vector.broadcast %3 : i32 to vector<32x1xi32>
    %5 = arith.remsi %1, %4 : vector<32x1xi32>
    %c0_i32_1 = arith.constant 0 : i32
    %6 = vector.broadcast %c0_i32_1 : i32 to vector<32x1xi32>
    %7 = arith.cmpi ne, %5, %6 : vector<32x1xi32>
    %c0_i32_2 = arith.constant 0 : i32
    %8 = vector.broadcast %c0_i32_2 : i32 to vector<32x1xi32>
    %9 = arith.cmpi slt, %5, %8 : vector<32x1xi32>
    %c0_i32_3 = arith.constant 0 : i32
    %10 = arith.cmpi slt, %3, %c0_i32_3 : i32
    %11 = vector.broadcast %10 : i1 to vector<32x1xi1>
    %12 = vector.broadcast %11 : vector<32x1xi1> to vector<32x1xi1>
    %13 = arith.xori %9, %12 : vector<32x1xi1>
    %14 = arith.andi %13, %7 : vector<32x1xi1>
    %15 = vector.broadcast %3 : i32 to vector<32x1xi32>
    %16 = arith.addi %5, %15 : vector<32x1xi32>
    %17 = arith.select %14, %16, %5 : vector<32x1xi1>, vector<32x1xi32>
    %c0_i32_4 = arith.constant 0 : i32
    %18 = vector.broadcast %c0_i32_4 : i32 to vector<32x1xi32>
    %19 = arith.cmpi ne, %17, %18 : vector<32x1xi32>
    %20 = arith.extui %19 : vector<32x1xi1> to vector<32x1xi32>
    %21 = arith.sitofp %20 : vector<32x1xi32> to vector<32x1xf32>
    %c16_i32_5 = arith.constant 16 : i32
    %c0_i32_6 = arith.constant 0 : i32
    %22 = arith.cmpi eq, %c16_i32_5, %c0_i32_6 : i32
    %c1_i32_7 = arith.constant 1 : i32
    %23 = arith.select %22, %c1_i32_7, %c16_i32_5 : i32
    %24 = vector.broadcast %23 : i32 to vector<32x1xi32>
    %25 = arith.remsi %1, %24 : vector<32x1xi32>
    %c0_i32_8 = arith.constant 0 : i32
    %26 = vector.broadcast %c0_i32_8 : i32 to vector<32x1xi32>
    %27 = arith.cmpi ne, %25, %26 : vector<32x1xi32>
    %c0_i32_9 = arith.constant 0 : i32
    %28 = vector.broadcast %c0_i32_9 : i32 to vector<32x1xi32>
    %29 = arith.cmpi slt, %25, %28 : vector<32x1xi32>
    %c0_i32_10 = arith.constant 0 : i32
    %30 = arith.cmpi slt, %23, %c0_i32_10 : i32
    %31 = vector.broadcast %30 : i1 to vector<32x1xi1>
    %32 = vector.broadcast %31 : vector<32x1xi1> to vector<32x1xi1>
    %33 = arith.xori %29, %32 : vector<32x1xi1>
    %34 = arith.andi %33, %27 : vector<32x1xi1>
    %35 = vector.broadcast %23 : i32 to vector<32x1xi32>
    %36 = arith.addi %25, %35 : vector<32x1xi32>
    %37 = arith.select %34, %36, %25 : vector<32x1xi1>, vector<32x1xi32>
    %c15_i32 = arith.constant 15 : i32
    %38 = vector.broadcast %c15_i32 : i32 to vector<32x1xi32>
    %39 = arith.cmpi ne, %37, %38 : vector<32x1xi32>
    %40 = arith.extui %39 : vector<32x1xi1> to vector<32x1xi32>
    %41 = arith.sitofp %40 : vector<32x1xi32> to vector<32x1xf32>
    %42 = tpu.iota {dimensions = array<i32: 0>} : vector<128x8xi32>
    %c8_i32 = arith.constant 8 : i32
    %c0_i32_11 = arith.constant 0 : i32
    %43 = arith.cmpi eq, %c8_i32, %c0_i32_11 : i32
    %c1_i32_12 = arith.constant 1 : i32
    %44 = arith.select %43, %c1_i32_12, %c8_i32 : i32
    %45 = vector.broadcast %44 : i32 to vector<128x8xi32>
    %46 = arith.remsi %42, %45 : vector<128x8xi32>
    %c0_i32_13 = arith.constant 0 : i32
    %47 = vector.broadcast %c0_i32_13 : i32 to vector<128x8xi32>
    %48 = arith.cmpi ne, %46, %47 : vector<128x8xi32>
    %c0_i32_14 = arith.constant 0 : i32
    %49 = vector.broadcast %c0_i32_14 : i32 to vector<128x8xi32>
    %50 = arith.cmpi slt, %46, %49 : vector<128x8xi32>
    %c0_i32_15 = arith.constant 0 : i32
    %51 = arith.cmpi slt, %44, %c0_i32_15 : i32
    %52 = vector.broadcast %51 : i1 to vector<128x8xi1>
    %53 = vector.broadcast %52 : vector<128x8xi1> to vector<128x8xi1>
    %54 = arith.xori %50, %53 : vector<128x8xi1>
    %55 = arith.andi %54, %48 : vector<128x8xi1>
    %56 = vector.broadcast %44 : i32 to vector<128x8xi32>
    %57 = arith.addi %46, %56 : vector<128x8xi32>
    %58 = arith.select %55, %57, %46 : vector<128x8xi1>, vector<128x8xi32>
    %59 = tpu.iota {dimensions = array<i32: 1>} : vector<128x8xi32>
    %60 = arith.cmpi eq, %58, %59 : vector<128x8xi32>
    %61 = arith.extui %60 : vector<128x8xi1> to vector<128x8xi32>
    %62 = arith.sitofp %61 : vector<128x8xi32> to vector<128x8xf32>
    %63 = tpu.iota {dimensions = array<i32: 1>} : vector<8x128xi32>
    %c8_i32_16 = arith.constant 8 : i32
    %c0_i32_17 = arith.constant 0 : i32
    %64 = arith.cmpi eq, %c8_i32_16, %c0_i32_17 : i32
    %c1_i32_18 = arith.constant 1 : i32
    %65 = arith.select %64, %c1_i32_18, %c8_i32_16 : i32
    %66 = vector.broadcast %65 : i32 to vector<8x128xi32>
    %67 = arith.remsi %63, %66 : vector<8x128xi32>
    %c0_i32_19 = arith.constant 0 : i32
    %68 = vector.broadcast %c0_i32_19 : i32 to vector<8x128xi32>
    %69 = arith.cmpi ne, %67, %68 : vector<8x128xi32>
    %c0_i32_20 = arith.constant 0 : i32
    %70 = vector.broadcast %c0_i32_20 : i32 to vector<8x128xi32>
    %71 = arith.cmpi slt, %67, %70 : vector<8x128xi32>
    %c0_i32_21 = arith.constant 0 : i32
    %72 = arith.cmpi slt, %65, %c0_i32_21 : i32
    %73 = vector.broadcast %72 : i1 to vector<8x128xi1>
    %74 = vector.broadcast %73 : vector<8x128xi1> to vector<8x128xi1>
    %75 = arith.xori %71, %74 : vector<8x128xi1>
    %76 = arith.andi %75, %69 : vector<8x128xi1>
    %77 = vector.broadcast %65 : i32 to vector<8x128xi32>
    %78 = arith.addi %67, %77 : vector<8x128xi32>
    %79 = arith.select %76, %78, %67 : vector<8x128xi1>, vector<8x128xi32>
    %80 = tpu.iota {dimensions = array<i32: 0>} : vector<8x128xi32>
    %81 = arith.cmpi eq, %79, %80 : vector<8x128xi32>
    %82 = arith.extui %81 : vector<8x128xi1> to vector<8x128xi32>
    %83 = arith.sitofp %82 : vector<8x128xi32> to vector<8x128xf32>
    %c1_i32_22 = arith.constant 1 : i32
    %84 = tpu.dynamic_rotate %0 by %c1_i32_22 dim 0 : vector<32x64xf32>, i32 -> vector<32x64xf32>
    %85 = vector.broadcast %21 : vector<32x1xf32> to vector<32x64xf32>
    %86 = arith.mulf %84, %85 : vector<32x64xf32>
    %c31_i32 = arith.constant 31 : i32
    %87 = tpu.dynamic_rotate %0 by %c31_i32 dim 0 : vector<32x64xf32>, i32 -> vector<32x64xf32>
    %88 = vector.broadcast %41 : vector<32x1xf32> to vector<32x64xf32>
    %89 = arith.mulf %87, %88 : vector<32x64xf32>
    %90 = tpu.concatenate %86, %0, %89 in 1 : vector<32x64xf32>, vector<32x64xf32>, vector<32x64xf32> -> vector<32x192xf32>
    %91 = arith.truncf %90 : vector<32x192xf32> to vector<32x192xbf16>
    %c0_23 = arith.constant 0 : index
    %c0_24 = arith.constant 0 : index
    %92 = vector.load %arg1[%c0_23, %c0_24] : memref<192x256xbf16, #tpu.memory_space<vmem>>, vector<192x256xbf16>
    %cst = arith.constant dense<0.000000e+00> : vector<32x256xf32>
    %93 = tpu.matmul %91, %92, %cst {dimension_numbers = #tpu.dot_dimension_numbers<[1], [0], [0], [1], [0, 0, 1, 1], [], []>} : vector<32x192xbf16>, vector<192x256xbf16>, vector<32x256xf32> -> vector<32x256xf32>
    %94 = vector.extract_strided_slice %93 {offsets = [0, 0], sizes = [32, 128], strides = [1, 1]} : vector<32x256xf32> to vector<32x128xf32>
    %95 = vector.extract_strided_slice %93 {offsets = [0, 128], sizes = [32, 128], strides = [1, 1]} : vector<32x256xf32> to vector<32x128xf32>
    %cst_25 = arith.constant dense<0.000000e+00> : vector<128xf32>
    %96 = vector.multi_reduction <add>, %94, %cst_25 [0] : vector<32x128xf32> to vector<128xf32>
    %97 = vector.shape_cast %96 : vector<128xf32> to vector<1x128xf32>
    %98 = arith.mulf %94, %94 : vector<32x128xf32>
    %cst_26 = arith.constant dense<0.000000e+00> : vector<128xf32>
    %99 = vector.multi_reduction <add>, %98, %cst_26 [0] : vector<32x128xf32> to vector<128xf32>
    %100 = vector.shape_cast %99 : vector<128xf32> to vector<1x128xf32>
    %101 = tpu.concatenate %97, %100 in 0 : vector<1x128xf32>, vector<1x128xf32> -> vector<2x128xf32>
    %cst_27 = arith.constant dense<0.000000e+00> : vector<2x8xf32>
    %102 = tpu.matmul %101, %62, %cst_27 {dimension_numbers = #tpu.dot_dimension_numbers<[1], [0], [0], [1], [0, 0, 1, 1], [], []>} : vector<2x128xf32>, vector<128x8xf32>, vector<2x8xf32> -> vector<2x8xf32>
    %c0_28 = arith.constant 0 : index
    %c0_29 = arith.constant 0 : index
    %103 = vector.load %arg3[%c0_28, %c0_29] : memref<6x8xf32, #tpu.memory_space<vmem>>, vector<1x8xf32>
    %c1 = arith.constant 1 : index
    %c0_30 = arith.constant 0 : index
    %104 = vector.load %arg3[%c1, %c0_30] : memref<6x8xf32, #tpu.memory_space<vmem>>, vector<1x8xf32>
    %105 = vector.extract_strided_slice %102 {offsets = [0, 0], sizes = [1, 8], strides = [1, 1]} : vector<2x8xf32> to vector<1x8xf32>
    %cst_31 = arith.constant 0.001953125 : f32
    %106 = vector.broadcast %cst_31 : f32 to vector<1x8xf32>
    %107 = arith.mulf %105, %106 : vector<1x8xf32>
    %108 = vector.extract_strided_slice %102 {offsets = [1, 0], sizes = [1, 8], strides = [1, 1]} : vector<2x8xf32> to vector<1x8xf32>
    %cst_32 = arith.constant 0.001953125 : f32
    %109 = vector.broadcast %cst_32 : f32 to vector<1x8xf32>
    %110 = arith.mulf %108, %109 : vector<1x8xf32>
    %111 = arith.mulf %107, %107 : vector<1x8xf32>
    %112 = arith.subf %110, %111 : vector<1x8xf32>
    %cst_33 = arith.constant 9.99999974E-6 : f32
    %113 = vector.broadcast %cst_33 : f32 to vector<1x8xf32>
    %114 = arith.addf %112, %113 : vector<1x8xf32>
    %115 = math.rsqrt %114 : vector<1x8xf32>
    %116 = arith.mulf %103, %115 : vector<1x8xf32>
    %117 = arith.mulf %107, %116 : vector<1x8xf32>
    %118 = arith.subf %104, %117 : vector<1x8xf32>
    %119 = tpu.concatenate %116, %118 in 0 : vector<1x8xf32>, vector<1x8xf32> -> vector<2x8xf32>
    %cst_34 = arith.constant dense<0.000000e+00> : vector<2x128xf32>
    %120 = tpu.matmul %119, %83, %cst_34 {dimension_numbers = #tpu.dot_dimension_numbers<[1], [0], [0], [1], [0, 0, 1, 1], [], []>} : vector<2x8xf32>, vector<8x128xf32>, vector<2x128xf32> -> vector<2x128xf32>
    %121 = vector.extract_strided_slice %120 {offsets = [0, 0], sizes = [1, 128], strides = [1, 1]} : vector<2x128xf32> to vector<1x128xf32>
    %122 = vector.broadcast %121 : vector<1x128xf32> to vector<32x128xf32>
    %123 = arith.mulf %94, %122 : vector<32x128xf32>
    %124 = vector.extract_strided_slice %120 {offsets = [1, 0], sizes = [1, 128], strides = [1, 1]} : vector<2x128xf32> to vector<1x128xf32>
    %125 = vector.broadcast %124 : vector<1x128xf32> to vector<32x128xf32>
    %126 = arith.addf %123, %125 : vector<32x128xf32>
    %cst_35 = arith.constant 0.000000e+00 : f32
    %127 = vector.broadcast %cst_35 : f32 to vector<32x128xf32>
    %128 = arith.maximumf %126, %127 : vector<32x128xf32>
    %c1_i32_36 = arith.constant 1 : i32
    %129 = tpu.dynamic_rotate %128 by %c1_i32_36 dim 0 : vector<32x128xf32>, i32 -> vector<32x128xf32>
    %130 = vector.broadcast %21 : vector<32x1xf32> to vector<32x128xf32>
    %131 = arith.mulf %129, %130 : vector<32x128xf32>
    %c31_i32_37 = arith.constant 31 : i32
    %132 = tpu.dynamic_rotate %128 by %c31_i32_37 dim 0 : vector<32x128xf32>, i32 -> vector<32x128xf32>
    %133 = vector.broadcast %41 : vector<32x1xf32> to vector<32x128xf32>
    %134 = arith.mulf %132, %133 : vector<32x128xf32>
    %135 = tpu.concatenate %131, %128, %134 in 1 : vector<32x128xf32>, vector<32x128xf32>, vector<32x128xf32> -> vector<32x384xf32>
    %136 = arith.truncf %135 : vector<32x384xf32> to vector<32x384xbf16>
    %c0_38 = arith.constant 0 : index
    %c0_39 = arith.constant 0 : index
    %137 = vector.load %arg2[%c0_38, %c0_39] : memref<384x128xbf16, #tpu.memory_space<vmem>>, vector<384x128xbf16>
    %cst_40 = arith.constant dense<0.000000e+00> : vector<32x128xf32>
    %138 = tpu.matmul %136, %137, %cst_40 {dimension_numbers = #tpu.dot_dimension_numbers<[1], [0], [0], [1], [0, 0, 1, 1], [], []>} : vector<32x384xbf16>, vector<384x128xbf16>, vector<32x128xf32> -> vector<32x128xf32>
    %cst_41 = arith.constant dense<0.000000e+00> : vector<128xf32>
    %139 = vector.multi_reduction <add>, %138, %cst_41 [0] : vector<32x128xf32> to vector<128xf32>
    %140 = vector.shape_cast %139 : vector<128xf32> to vector<1x128xf32>
    %141 = arith.mulf %138, %138 : vector<32x128xf32>
    %cst_42 = arith.constant dense<0.000000e+00> : vector<128xf32>
    %142 = vector.multi_reduction <add>, %141, %cst_42 [0] : vector<32x128xf32> to vector<128xf32>
    %143 = vector.shape_cast %142 : vector<128xf32> to vector<1x128xf32>
    %144 = tpu.concatenate %140, %143 in 0 : vector<1x128xf32>, vector<1x128xf32> -> vector<2x128xf32>
    %cst_43 = arith.constant dense<0.000000e+00> : vector<128xf32>
    %145 = vector.multi_reduction <add>, %95, %cst_43 [0] : vector<32x128xf32> to vector<128xf32>
    %146 = vector.shape_cast %145 : vector<128xf32> to vector<1x128xf32>
    %147 = arith.mulf %95, %95 : vector<32x128xf32>
    %cst_44 = arith.constant dense<0.000000e+00> : vector<128xf32>
    %148 = vector.multi_reduction <add>, %147, %cst_44 [0] : vector<32x128xf32> to vector<128xf32>
    %149 = vector.shape_cast %148 : vector<128xf32> to vector<1x128xf32>
    %150 = tpu.concatenate %146, %149 in 0 : vector<1x128xf32>, vector<1x128xf32> -> vector<2x128xf32>
    %151 = tpu.concatenate %144, %150 in 0 : vector<2x128xf32>, vector<2x128xf32> -> vector<4x128xf32>
    %cst_45 = arith.constant dense<0.000000e+00> : vector<4x8xf32>
    %152 = tpu.matmul %151, %62, %cst_45 {dimension_numbers = #tpu.dot_dimension_numbers<[1], [0], [0], [1], [0, 0, 1, 1], [], []>} : vector<4x128xf32>, vector<128x8xf32>, vector<4x8xf32> -> vector<4x8xf32>
    %153 = vector.extract_strided_slice %152 {offsets = [0, 0], sizes = [2, 8], strides = [1, 1]} : vector<4x8xf32> to vector<2x8xf32>
    %c2 = arith.constant 2 : index
    %c0_46 = arith.constant 0 : index
    %154 = vector.load %arg3[%c2, %c0_46] : memref<6x8xf32, #tpu.memory_space<vmem>>, vector<1x8xf32>
    %c3 = arith.constant 3 : index
    %c0_47 = arith.constant 0 : index
    %155 = vector.load %arg3[%c3, %c0_47] : memref<6x8xf32, #tpu.memory_space<vmem>>, vector<1x8xf32>
    %156 = vector.extract_strided_slice %153 {offsets = [0, 0], sizes = [1, 8], strides = [1, 1]} : vector<2x8xf32> to vector<1x8xf32>
    %cst_48 = arith.constant 0.001953125 : f32
    %157 = vector.broadcast %cst_48 : f32 to vector<1x8xf32>
    %158 = arith.mulf %156, %157 : vector<1x8xf32>
    %159 = vector.extract_strided_slice %153 {offsets = [1, 0], sizes = [1, 8], strides = [1, 1]} : vector<2x8xf32> to vector<1x8xf32>
    %cst_49 = arith.constant 0.001953125 : f32
    %160 = vector.broadcast %cst_49 : f32 to vector<1x8xf32>
    %161 = arith.mulf %159, %160 : vector<1x8xf32>
    %162 = arith.mulf %158, %158 : vector<1x8xf32>
    %163 = arith.subf %161, %162 : vector<1x8xf32>
    %cst_50 = arith.constant 9.99999974E-6 : f32
    %164 = vector.broadcast %cst_50 : f32 to vector<1x8xf32>
    %165 = arith.addf %163, %164 : vector<1x8xf32>
    %166 = math.rsqrt %165 : vector<1x8xf32>
    %167 = arith.mulf %154, %166 : vector<1x8xf32>
    %168 = arith.mulf %158, %167 : vector<1x8xf32>
    %169 = arith.subf %155, %168 : vector<1x8xf32>
    %170 = vector.extract_strided_slice %152 {offsets = [2, 0], sizes = [2, 8], strides = [1, 1]} : vector<4x8xf32> to vector<2x8xf32>
    %c4 = arith.constant 4 : index
    %c0_51 = arith.constant 0 : index
    %171 = vector.load %arg3[%c4, %c0_51] : memref<6x8xf32, #tpu.memory_space<vmem>>, vector<1x8xf32>
    %c5 = arith.constant 5 : index
    %c0_52 = arith.constant 0 : index
    %172 = vector.load %arg3[%c5, %c0_52] : memref<6x8xf32, #tpu.memory_space<vmem>>, vector<1x8xf32>
    %173 = vector.extract_strided_slice %170 {offsets = [0, 0], sizes = [1, 8], strides = [1, 1]} : vector<2x8xf32> to vector<1x8xf32>
    %cst_53 = arith.constant 0.001953125 : f32
    %174 = vector.broadcast %cst_53 : f32 to vector<1x8xf32>
    %175 = arith.mulf %173, %174 : vector<1x8xf32>
    %176 = vector.extract_strided_slice %170 {offsets = [1, 0], sizes = [1, 8], strides = [1, 1]} : vector<2x8xf32> to vector<1x8xf32>
    %cst_54 = arith.constant 0.001953125 : f32
    %177 = vector.broadcast %cst_54 : f32 to vector<1x8xf32>
    %178 = arith.mulf %176, %177 : vector<1x8xf32>
    %179 = arith.mulf %175, %175 : vector<1x8xf32>
    %180 = arith.subf %178, %179 : vector<1x8xf32>
    %cst_55 = arith.constant 9.99999974E-6 : f32
    %181 = vector.broadcast %cst_55 : f32 to vector<1x8xf32>
    %182 = arith.addf %180, %181 : vector<1x8xf32>
    %183 = math.rsqrt %182 : vector<1x8xf32>
    %184 = arith.mulf %171, %183 : vector<1x8xf32>
    %185 = arith.mulf %175, %184 : vector<1x8xf32>
    %186 = arith.subf %172, %185 : vector<1x8xf32>
    %187 = tpu.concatenate %167, %169, %184, %186 in 0 : vector<1x8xf32>, vector<1x8xf32>, vector<1x8xf32>, vector<1x8xf32> -> vector<4x8xf32>
    %cst_56 = arith.constant dense<0.000000e+00> : vector<4x128xf32>
    %188 = tpu.matmul %187, %83, %cst_56 {dimension_numbers = #tpu.dot_dimension_numbers<[1], [0], [0], [1], [0, 0, 1, 1], [], []>} : vector<4x8xf32>, vector<8x128xf32>, vector<4x128xf32> -> vector<4x128xf32>
    %189 = vector.extract_strided_slice %188 {offsets = [0, 0], sizes = [1, 128], strides = [1, 1]} : vector<4x128xf32> to vector<1x128xf32>
    %190 = vector.broadcast %189 : vector<1x128xf32> to vector<32x128xf32>
    %191 = arith.mulf %138, %190 : vector<32x128xf32>
    %192 = vector.extract_strided_slice %188 {offsets = [1, 0], sizes = [1, 128], strides = [1, 1]} : vector<4x128xf32> to vector<1x128xf32>
    %193 = vector.broadcast %192 : vector<1x128xf32> to vector<32x128xf32>
    %194 = arith.addf %191, %193 : vector<32x128xf32>
    %195 = vector.extract_strided_slice %188 {offsets = [2, 0], sizes = [1, 128], strides = [1, 1]} : vector<4x128xf32> to vector<1x128xf32>
    %196 = vector.broadcast %195 : vector<1x128xf32> to vector<32x128xf32>
    %197 = arith.mulf %95, %196 : vector<32x128xf32>
    %198 = arith.addf %194, %197 : vector<32x128xf32>
    %199 = vector.extract_strided_slice %188 {offsets = [3, 0], sizes = [1, 128], strides = [1, 1]} : vector<4x128xf32> to vector<1x128xf32>
    %200 = vector.broadcast %199 : vector<1x128xf32> to vector<32x128xf32>
    %201 = arith.addf %198, %200 : vector<32x128xf32>
    %cst_57 = arith.constant 0.000000e+00 : f32
    %202 = vector.broadcast %cst_57 : f32 to vector<32x128xf32>
    %203 = arith.maximumf %201, %202 : vector<32x128xf32>
    %c0_58 = arith.constant 0 : index
    %c0_59 = arith.constant 0 : index
    %204 = vector.load %arg4[%c0_58, %c0_59] : memref<32x128xf32, #tpu.memory_space<vmem>>, vector<32x128xf32>
    tpu.vector_store %arg4[%c0_58, %c0_59], %203 {strides = array<i32>} : memref<32x128xf32, #tpu.memory_space<vmem>>, vector<32x128xf32>,
    return
  }
}

</mosaic_0001>

<llo_original>
// kernel: tpu_custom_call.1
$region0: #{tpu_custom_call.1}
  #allocation0 [shape = 'u32[]', space=smem, size = 0x4, offset = 0x4, fixed_abs, tag = 'smem constant byte address 0x4 - core index']
  #allocation1 [shape = 'u32[144,128]{1,0:T(1,128)}', space=vmem, size = 0x12000, scoped, tag = 'internal scratch']
  %s0 = inlined_call_operand.hbm [shape: f32[32,64], index: 0, kind: input, shape index: {}]
  %s1 = inlined_call_operand.hbm [shape: bf16[192,256], index: 1, kind: input, shape index: {}]
  %s2 = inlined_call_operand.hbm [shape: bf16[384,128], index: 2, kind: input, shape index: {}]
  %s3 = inlined_call_operand.vmem [shape: f32[6,8], index: 3, kind: input, shape index: {}]
  %s4 = inlined_call_operand.hbm [shape: f32[32,128], index: 4, kind: output, shape index: {}]
  %s5 = sld [smem:[#allocation0]]
  $region38: #{tpu_custom_call.1} parent=0
    _
  %s7 = ssub.s32 1, %s5
  %s8 = scalar_select 0, %s7, %s5
  $region1: #{tpu_custom_call.1} parent=0
    #allocation2 [shape = 'u8[16384]{0}', space=vmem, size = 0x4000, scoped, tag = 'input window, operand 0, single buffered']
    #allocation3 [shape = 's32[1]{0}', space=sflag, size = 0x4, scoped, tag = 'scoped memory for tpu_custom_call.1']
    #allocation4 [shape = 's32[1]{0}', space=sflag, size = 0x4, scoped, tag = 'scoped memory for tpu_custom_call.1']
    #allocation5 [shape = 'u8[98304]{0}', space=vmem, size = 0x18000, scoped, tag = 'input window, operand 1, single buffered']
    #allocation6 [shape = 's32[1]{0}', space=sflag, size = 0x4, scoped, tag = 'scoped memory for tpu_custom_call.1']
    #allocation7 [shape = 'u8[98304]{0}', space=vmem, size = 0x18000, scoped, tag = 'input window, operand 2, single buffered']
    #allocation8 [shape = 'u8[16384]{0}', space=vmem, size = 0x4000, scoped, tag = 'output window, operand 0, single buffered']
    %9 = vsyncpa [#allocation3], 0
    %10 = vsyncpa [#allocation6], 0
    %11 = vsyncpa [#allocation4], 0
    // Predicated region
    $region2: #{tpu_custom_call.1} parent=1 // pred_check
      _
    $region3: #{tpu_custom_call.1} parent=1 // pred_check_branch
      %13 = sbr.rel (0) target = $region5
    $region4: #{tpu_custom_call.1} parent=1 // pred_region
      %s15 = ssub.s32 512, 512
      %16 = vsyncadd [#allocation3], %s15
      %s17 = sshll.u32 [#allocation2], 4
      %s18 = int_to_ptr.vmem [resolvable:$true] %s17
      %23 = dma.hbm_to_vmem [thread:$0]  %s0, 512, %s18, [#allocation3], 128, 128, 8
    $region5: #{tpu_custom_call.1} parent=1 // pred_fallthru
      _
    // Predicated region
    $region6: #{tpu_custom_call.1} parent=1 // pred_check
      _
    $region7: #{tpu_custom_call.1} parent=1 // pred_check_branch
      %25 = sbr.rel (0) target = $region9
    $region8: #{tpu_custom_call.1} parent=1 // pred_region
      %s27 = ssub.s32 3072, 3072
      %28 = vsyncadd [#allocation6], %s27
      %s29 = sshll.u32 [#allocation5], 4
      %s30 = int_to_ptr.vmem [resolvable:$true] %s29
      %35 = dma.hbm_to_vmem [thread:$0]  %s1, 3072, %s30, [#allocation6], 128, 128, 8
    $region9: #{tpu_custom_call.1} parent=1 // pred_fallthru
      _
    // Predicated region
    $region10: #{tpu_custom_call.1} parent=1 // pred_check
      _
    $region11: #{tpu_custom_call.1} parent=1 // pred_check_branch
      %37 = sbr.rel (0) target = $region13
    $region12: #{tpu_custom_call.1} parent=1 // pred_region
      %s39 = ssub.s32 3072, 3072
      %40 = vsyncadd [#allocation6], %s39
      %s41 = sshll.u32 [#allocation7], 4
      %s42 = int_to_ptr.vmem [resolvable:$true] %s41
      %47 = dma.hbm_to_vmem [thread:$0]  %s2, 3072, %s42, [#allocation6], 64, 64, 4
    $region13: #{tpu_custom_call.1} parent=1 // pred_fallthru
      _
    // Predicated region
    $region14: #{tpu_custom_call.1} parent=1 // pred_check
      _
    $region15: #{tpu_custom_call.1} parent=1 // pred_check_branch
      %49 = sbr.rel (0) target = $region17
    $region16: #{tpu_custom_call.1} parent=1 // pred_region
      _
    $region17: #{tpu_custom_call.1} parent=1 // pred_fallthru
      _
    // Predicated region
    $region18: #{tpu_custom_call.1} parent=1 // pred_check
      _
    $region19: #{tpu_custom_call.1} parent=1 // pred_check_branch
      %51 = sbr.rel (0) target = $region21
    $region20: #{tpu_custom_call.1} parent=1 // pred_region
      %52 = dma.done [#allocation3], 512
    $region21: #{tpu_custom_call.1} parent=1 // pred_fallthru
      _
    // Predicated region
    $region22: #{tpu_custom_call.1} parent=1 // pred_check
      _
    $region23: #{tpu_custom_call.1} parent=1 // pred_check_branch
      %54 = sbr.rel (0) target = $region25
    $region24: #{tpu_custom_call.1} parent=1 // pred_region
      %55 = dma.done [#allocation6], 3072
    $region25: #{tpu_custom_call.1} parent=1 // pred_fallthru
      _
    // Predicated region
    $region26: #{tpu_custom_call.1} parent=1 // pred_check
      _
    $region27: #{tpu_custom_call.1} parent=1 // pred_check_branch
      %57 = sbr.rel (0) target = $region29
    $region28: #{tpu_custom_call.1} parent=1 // pred_region
      %58 = dma.done [#allocation6], 3072
    $region29: #{tpu_custom_call.1} parent=1 // pred_fallthru
      _
    %v60 = vld [vmem:[#allocation2] sm:$0xff]
    %v61 = vld [vmem:[#allocation2 + $0x8] sm:$0xff]
    %v62 = vld [vmem:[#allocation2 + $0x10] sm:$0xff]
    %v63 = vld [vmem:[#allocation2 + $0x18] sm:$0xff]
    %v64 = vlaneseq
    %v65 = vshrl.u32 %v64, 7
    %v66 = vadd.s32 %v65, 8
    %v67 = vadd.s32 %v65, 16
    %v68 = vadd.s32 %v65, 24
    %vm69 = vcmp.lt.s32.totalorder %v65, 0
    %v70 = vsub.s32 0, %v65
    %v71 = vsel %vm69, %v70, %v65
    %v72 = vshrl.u32 %v71, 4
    %v73 = vand.u32 %v71, 15
    %v74 = vsub.s32 0, %v73
    %v75 = vsel %vm69, %v74, %v73
    %vm76 = vcmp.lt.s32.totalorder %v66, 0
    %v77 = vsub.s32 0, %v66
    %v78 = vsel %vm76, %v77, %v66
    %v79 = vshrl.u32 %v78, 4
    %v80 = vand.u32 %v78, 15
    %v81 = vsub.s32 0, %v80
    %v82 = vsel %vm76, %v81, %v80
    %vm83 = vcmp.lt.s32.totalorder %v67, 0
    %v84 = vsub.s32 0, %v67
    %v85 = vsel %vm83, %v84, %v67
    %v86 = vshrl.u32 %v85, 4
    %v87 = vand.u32 %v85, 15
    %v88 = vsub.s32 0, %v87
    %v89 = vsel %vm83, %v88, %v87
    %vm90 = vcmp.lt.s32.totalorder %v68, 0
    %v91 = vsub.s32 0, %v68
    %v92 = vsel %vm90, %v91, %v68
    %v93 = vshrl.u32 %v92, 4
    %v94 = vand.u32 %v92, 15
    %v95 = vsub.s32 0, %v94
    %v96 = vsel %vm90, %v95, %v94
    %vm97 = vcmp.ne.s32.totalorder %v75, 0
    %vm98 = vcmp.ne.s32.totalorder %v82, 0
    %vm99 = vcmp.ne.s32.totalorder %v89, 0
    %vm100 = vcmp.ne.s32.totalorder %v96, 0
    %vm101 = vcmp.lt.s32.totalorder %v75, 0
    %vm102 = vcmp.lt.s32.totalorder %v82, 0
    %vm103 = vcmp.lt.s32.totalorder %v89, 0
    %vm104 = vcmp.lt.s32.totalorder %v96, 0
    %vm105 = vmand %vm101, %vm97
    %vm106 = vmand %vm102, %vm98
    %vm107 = vmand %vm103, %vm99
    %vm108 = vmand %vm104, %vm100
    %v109 = vadd.s32 %v75, 16
    %v110 = vadd.s32 %v82, 16
    %v111 = vadd.s32 %v89, 16
    %v112 = vadd.s32 %v96, 16
    %v113 = vsel %vm105, %v109, %v75
    %v114 = vsel %vm106, %v110, %v82
    %v115 = vsel %vm107, %v111, %v89
    %v116 = vsel %vm108, %v112, %v96
    %vm117 = vcmp.ne.s32.totalorder %v113, 0
    %vm118 = vcmp.ne.s32.totalorder %v114, 0
    %vm119 = vcmp.ne.s32.totalorder %v115, 0
    %vm120 = vcmp.ne.s32.totalorder %v116, 0
    %v121 = vsel %vm117, 1, 0
    %v122 = vsel %vm118, 1, 0
    %v123 = vsel %vm119, 1, 0
    %v124 = vsel %vm120, 1, 0
    %v125 = vcvt.s32.f32 %v121
    %v126 = vcvt.s32.f32 %v122
    %v127 = vcvt.s32.f32 %v123
    %v128 = vcvt.s32.f32 %v124
    %vm129 = vcmp.ne.s32.totalorder %v113, 15
    %vm130 = vcmp.ne.s32.totalorder %v114, 15
    %vm131 = vcmp.ne.s32.totalorder %v115, 15
    %vm132 = vcmp.ne.s32.totalorder %v116, 15
    %v133 = vsel %vm129, 1, 0
    %v134 = vsel %vm130, 1, 0
    %v135 = vsel %vm131, 1, 0
    %v136 = vsel %vm132, 1, 0
    %v137 = vcvt.s32.f32 %v133
    %v138 = vcvt.s32.f32 %v134
    %v139 = vcvt.s32.f32 %v135
    %v140 = vcvt.s32.f32 %v136
    %v141 = vadd.s32 %v65, 32
    %v142 = vadd.s32 %v65, 40
    %v143 = vadd.s32 %v65, 48
    %v144 = vadd.s32 %v65, 56
    %v145 = vadd.s32 %v65, 64
    %v146 = vadd.s32 %v65, 72
    %v147 = vadd.s32 %v65, 80
    %v148 = vadd.s32 %v65, 88
    %v149 = vadd.s32 %v65, 96
    %v150 = vadd.s32 %v65, 104
    %v151 = vadd.s32 %v65, 112
    %v152 = vadd.s32 %v65, 120
    %vm153 = vcmp.lt.s32.totalorder %v65, 0
    %v154 = vsub.s32 0, %v65
    %v155 = vsel %vm153, %v154, %v65
    %v156 = vshrl.u32 %v155, 3
    %v157 = vand.u32 %v155, 7
    %v158 = vsub.s32 0, %v157
    %v159 = vsel %vm153, %v158, %v157
    %vm160 = vcmp.lt.s32.totalorder %v66, 0
    %v161 = vsub.s32 0, %v66
    %v162 = vsel %vm160, %v161, %v66
    %v163 = vshrl.u32 %v162, 3
    %v164 = vand.u32 %v162, 7
    %v165 = vsub.s32 0, %v164
    %v166 = vsel %vm160, %v165, %v164
    %vm167 = vcmp.lt.s32.totalorder %v67, 0
    %v168 = vsub.s32 0, %v67
    %v169 = vsel %vm167, %v168, %v67
    %v170 = vshrl.u32 %v169, 3
    %v171 = vand.u32 %v169, 7
    %v172 = vsub.s32 0, %v171
    %v173 = vsel %vm167, %v172, %v171
    %vm174 = vcmp.lt.s32.totalorder %v68, 0
    %v175 = vsub.s32 0, %v68
    %v176 = vsel %vm174, %v175, %v68
    %v177 = vshrl.u32 %v176, 3
    %v178 = vand.u32 %v176, 7
    %v179 = vsub.s32 0, %v178
    %v180 = vsel %vm174, %v179, %v178
    %vm181 = vcmp.lt.s32.totalorder %v141, 0
    %v182 = vsub.s32 0, %v141
    %v183 = vsel %vm181, %v182, %v141
    %v184 = vshrl.u32 %v183, 3
    %v185 = vand.u32 %v183, 7
    %v186 = vsub.s32 0, %v185
    %v187 = vsel %vm181, %v186, %v185
    %vm188 = vcmp.lt.s32.totalorder %v142, 0
    %v189 = vsub.s32 0, %v142
    %v190 = vsel %vm188, %v189, %v142
    %v191 = vshrl.u32 %v190, 3
    %v192 = vand.u32 %v190, 7
    %v193 = vsub.s32 0, %v192
    %v194 = vsel %vm188, %v193, %v192
    %vm195 = vcmp.lt.s32.totalorder %v143, 0
    %v196 = vsub.s32 0, %v143
    %v197 = vsel %vm195, %v196, %v143
    %v198 = vshrl.u32 %v197, 3
    %v199 = vand.u32 %v197, 7
    %v200 = vsub.s32 0, %v199
    %v201 = vsel %vm195, %v200, %v199
    %vm202 = vcmp.lt.s32.totalorder %v144, 0
    %v203 = vsub.s32 0, %v144
    %v204 = vsel %vm202, %v203, %v144
    %v205 = vshrl.u32 %v204, 3
    %v206 = vand.u32 %v204, 7
    %v207 = vsub.s32 0, %v206
    %v208 = vsel %vm202, %v207, %v206
    %vm209 = vcmp.lt.s32.totalorder %v145, 0
    %v210 = vsub.s32 0, %v145
    %v211 = vsel %vm209, %v210, %v145
    %v212 = vshrl.u32 %v211, 3
    %v213 = vand.u32 %v211, 7
    %v214 = vsub.s32 0, %v213
    %v215 = vsel %vm209, %v214, %v213
    %vm216 = vcmp.lt.s32.totalorder %v146, 0
    %v217 = vsub.s32 0, %v146
    %v218 = vsel %vm216, %v217, %v146
    %v219 = vshrl.u32 %v218, 3
    %v220 = vand.u32 %v218, 7
    %v221 = vsub.s32 0, %v220
    %v222 = vsel %vm216, %v221, %v220
    %vm223 = vcmp.lt.s32.totalorder %v147, 0
    %v224 = vsub.s32 0, %v147
    %v225 = vsel %vm223, %v224, %v147
    %v226 = vshrl.u32 %v225, 3
    %v227 = vand.u32 %v225, 7
    %v228 = vsub.s32 0, %v227
    %v229 = vsel %vm223, %v228, %v227
    %vm230 = vcmp.lt.s32.totalorder %v148, 0
    %v231 = vsub.s32 0, %v148
    %v232 = vsel %vm230, %v231, %v148
    %v233 = vshrl.u32 %v232, 3
    %v234 = vand.u32 %v232, 7
    %v235 = vsub.s32 0, %v234
    %v236 = vsel %vm230, %v235, %v234
    %vm237 = vcmp.lt.s32.totalorder %v149, 0
    %v238 = vsub.s32 0, %v149
    %v239 = vsel %vm237, %v238, %v149
    %v240 = vshrl.u32 %v239, 3
    %v241 = vand.u32 %v239, 7
    %v242 = vsub.s32 0, %v241
    %v243 = vsel %vm237, %v242, %v241
    %vm244 = vcmp.lt.s32.totalorder %v150, 0
    %v245 = vsub.s32 0, %v150
    %v246 = vsel %vm244, %v245, %v150
    %v247 = vshrl.u32 %v246, 3
    %v248 = vand.u32 %v246, 7
    %v249 = vsub.s32 0, %v248
    %v250 = vsel %vm244, %v249, %v248
    %vm251 = vcmp.lt.s32.totalorder %v151, 0
    %v252 = vsub.s32 0, %v151
    %v253 = vsel %vm251, %v252, %v151
    %v254 = vshrl.u32 %v253, 3
    %v255 = vand.u32 %v253, 7
    %v256 = vsub.s32 0, %v255
    %v257 = vsel %vm251, %v256, %v255
    %vm258 = vcmp.lt.s32.totalorder %v152, 0
    %v259 = vsub.s32 0, %v152
    %v260 = vsel %vm258, %v259, %v152
    %v261 = vshrl.u32 %v260, 3
    %v262 = vand.u32 %v260, 7
    %v263 = vsub.s32 0, %v262
    %v264 = vsel %vm258, %v263, %v262
    %vm265 = vcmp.ne.s32.totalorder %v159, 0
    %vm266 = vcmp.ne.s32.totalorder %v166, 0
    %vm267 = vcmp.ne.s32.totalorder %v173, 0
    %vm268 = vcmp.ne.s32.totalorder %v180, 0
    %vm269 = vcmp.ne.s32.totalorder %v187, 0
    %vm270 = vcmp.ne.s32.totalorder %v194, 0
    %vm271 = vcmp.ne.s32.totalorder %v201, 0
    %vm272 = vcmp.ne.s32.totalorder %v208, 0
    %vm273 = vcmp.ne.s32.totalorder %v215, 0
    %vm274 = vcmp.ne.s32.totalorder %v222, 0
    %vm275 = vcmp.ne.s32.totalorder %v229, 0
    %vm276 = vcmp.ne.s32.totalorder %v236, 0
    %vm277 = vcmp.ne.s32.totalorder %v243, 0
    %vm278 = vcmp.ne.s32.totalorder %v250, 0
    %vm279 = vcmp.ne.s32.totalorder %v257, 0
    %vm280 = vcmp.ne.s32.totalorder %v264, 0
    %vm281 = vcmp.lt.s32.totalorder %v159, 0
    %vm282 = vcmp.lt.s32.totalorder %v166, 0
    %vm283 = vcmp.lt.s32.totalorder %v173, 0
    %vm284 = vcmp.lt.s32.totalorder %v180, 0
    %vm285 = vcmp.lt.s32.totalorder %v187, 0
    %vm286 = vcmp.lt.s32.totalorder %v194, 0
    %vm287 = vcmp.lt.s32.totalorder %v201, 0
    %vm288 = vcmp.lt.s32.totalorder %v208, 0
    %vm289 = vcmp.lt.s32.totalorder %v215, 0
    %vm290 = vcmp.lt.s32.totalorder %v222, 0
    %vm291 = vcmp.lt.s32.totalorder %v229, 0
    %vm292 = vcmp.lt.s32.totalorder %v236, 0
    %vm293 = vcmp.lt.s32.totalorder %v243, 0
    %vm294 = vcmp.lt.s32.totalorder %v250, 0
    %vm295 = vcmp.lt.s32.totalorder %v257, 0
    %vm296 = vcmp.lt.s32.totalorder %v264, 0
    %vm297 = vmand %vm281, %vm265
    %vm298 = vmand %vm282, %vm266
    %vm299 = vmand %vm283, %vm267
    %vm300 = vmand %vm284, %vm268
    %vm301 = vmand %vm285, %vm269
    %vm302 = vmand %vm286, %vm270
    %vm303 = vmand %vm287, %vm271
    %vm304 = vmand %vm288, %vm272
    %vm305 = vmand %vm289, %vm273
    %vm306 = vmand %vm290, %vm274
    %vm307 = vmand %vm291, %vm275
    %vm308 = vmand %vm292, %vm276
    %vm309 = vmand %vm293, %vm277
    %vm310 = vmand %vm294, %vm278
    %vm311 = vmand %vm295, %vm279
    %vm312 = vmand %vm296, %vm280
    %v313 = vadd.s32 %v159, 8
    %v314 = vadd.s32 %v166, 8
    %v315 = vadd.s32 %v173, 8
    %v316 = vadd.s32 %v180, 8
    %v317 = vadd.s32 %v187, 8
    %v318 = vadd.s32 %v194, 8
    %v319 = vadd.s32 %v201, 8
    %v320 = vadd.s32 %v208, 8
    %v321 = vadd.s32 %v215, 8
    %v322 = vadd.s32 %v222, 8
    %v323 = vadd.s32 %v229, 8
    %v324 = vadd.s32 %v236, 8
    %v325 = vadd.s32 %v243, 8
    %v326 = vadd.s32 %v250, 8
    %v327 = vadd.s32 %v257, 8
    %v328 = vadd.s32 %v264, 8
    %v329 = vsel %vm297, %v313, %v159
    %v330 = vsel %vm298, %v314, %v166
    %v331 = vsel %vm299, %v315, %v173
    %v332 = vsel %vm300, %v316, %v180
    %v333 = vsel %vm301, %v317, %v187
    %v334 = vsel %vm302, %v318, %v194
    %v335 = vsel %vm303, %v319, %v201
    %v336 = vsel %vm304, %v320, %v208
    %v337 = vsel %vm305, %v321, %v215
    %v338 = vsel %vm306, %v322, %v222
    %v339 = vsel %vm307, %v323, %v229
    %v340 = vsel %vm308, %v324, %v236
    %v341 = vsel %vm309, %v325, %v243
    %v342 = vsel %vm310, %v326, %v250
    %v343 = vsel %vm311, %v327, %v257
    %v344 = vsel %vm312, %v328, %v264
    %v345 = vlaneseq
    %v346 = vand.u32 %v345, 127
    %vm347 = vcmp.eq.s32.totalorder %v329, %v346
    %vm348 = vcmp.eq.s32.totalorder %v330, %v346
    %vm349 = vcmp.eq.s32.totalorder %v331, %v346
    %vm350 = vcmp.eq.s32.totalorder %v332, %v346
    %vm351 = vcmp.eq.s32.totalorder %v333, %v346
    %vm352 = vcmp.eq.s32.totalorder %v334, %v346
    %vm353 = vcmp.eq.s32.totalorder %v335, %v346
    %vm354 = vcmp.eq.s32.totalorder %v336, %v346
    %vm355 = vcmp.eq.s32.totalorder %v337, %v346
    %vm356 = vcmp.eq.s32.totalorder %v338, %v346
    %vm357 = vcmp.eq.s32.totalorder %v339, %v346
    %vm358 = vcmp.eq.s32.totalorder %v340, %v346
    %vm359 = vcmp.eq.s32.totalorder %v341, %v346
    %vm360 = vcmp.eq.s32.totalorder %v342, %v346
    %vm361 = vcmp.eq.s32.totalorder %v343, %v346
    %vm362 = vcmp.eq.s32.totalorder %v344, %v346
    %v363 = vsel %vm347, 1, 0
    %v364 = vsel %vm348, 1, 0
    %v365 = vsel %vm349, 1, 0
    %v366 = vsel %vm350, 1, 0
    %v367 = vsel %vm351, 1, 0
    %v368 = vsel %vm352, 1, 0
    %v369 = vsel %vm353, 1, 0
    %v370 = vsel %vm354, 1, 0
    %v371 = vsel %vm355, 1, 0
    %v372 = vsel %vm356, 1, 0
    %v373 = vsel %vm357, 1, 0
    %v374 = vsel %vm358, 1, 0
    %v375 = vsel %vm359, 1, 0
    %v376 = vsel %vm360, 1, 0
    %v377 = vsel %vm361, 1, 0
    %v378 = vsel %vm362, 1, 0
    %v379 = vcvt.s32.f32 %v363
    %v380 = vcvt.s32.f32 %v364
    %v381 = vcvt.s32.f32 %v365
    %v382 = vcvt.s32.f32 %v366
    %v383 = vcvt.s32.f32 %v367
    %v384 = vcvt.s32.f32 %v368
    %v385 = vcvt.s32.f32 %v369
    %v386 = vcvt.s32.f32 %v370
    %v387 = vcvt.s32.f32 %v371
    %v388 = vcvt.s32.f32 %v372
    %v389 = vcvt.s32.f32 %v373
    %v390 = vcvt.s32.f32 %v374
    %v391 = vcvt.s32.f32 %v375
    %v392 = vcvt.s32.f32 %v376
    %v393 = vcvt.s32.f32 %v377
    %v394 = vcvt.s32.f32 %v378
    %vm395 = vcmp.lt.s32.totalorder %v346, 0
    %v396 = vsub.s32 0, %v346
    %v397 = vsel %vm395, %v396, %v346
    %v398 = vshrl.u32 %v397, 3
    %v399 = vand.u32 %v397, 7
    %v400 = vsub.s32 0, %v399
    %v401 = vsel %vm395, %v400, %v399
    %vm402 = vcmp.ne.s32.totalorder %v401, 0
    %vm403 = vcmp.lt.s32.totalorder %v401, 0
    %vm404 = vmand %vm403, %vm402
    %v405 = vadd.s32 %v401, 8
    %v406 = vsel %vm404, %v405, %v401
    %vm407 = vcmp.eq.s32.totalorder %v406, %v65
    %v408 = vsel %vm407, 1, 0
    %v409 = vcvt.s32.f32 %v408
    %v410 = vrot.slane %v60, 7
    %v411 = vrot.slane %v61, 7
    %v412 = vrot.slane %v62, 7
    %v413 = vrot.slane %v63, 7
    %vm414 = vcmp.lt.s32.totalorder %v65, 1
    %v415 = vsel %vm414, %v412, %v413
    %v416 = vsel %vm414, %v411, %v412
    %v417 = vsel %vm414, %v410, %v411
    %v418 = vsel %vm414, %v413, %v410
    %v419 = vmul.f32 %v418, %v125
    %v420 = vmul.f32 %v417, %v126
    %v421 = vmul.f32 %v416, %v127
    %v422 = vmul.f32 %v415, %v128
    %v423 = vrot.slane %v60, 1
    %v424 = vrot.slane %v61, 1
    %v425 = vrot.slane %v62, 1
    %v426 = vrot.slane %v63, 1
    %vm427 = vcmp.lt.s32.totalorder %v65, 7
    %v428 = vsel %vm427, %v425, %v426
    %v429 = vsel %vm427, %v424, %v425
    %v430 = vsel %vm427, %v423, %v424
    %v431 = vsel %vm427, %v426, %v423
    %v432 = vmul.f32 %v430, %v137
    %v433 = vmul.f32 %v429, %v138
    %v434 = vmul.f32 %v428, %v139
    %v435 = vmul.f32 %v431, %v140
    %440 = vrot.lane.b32.xlu0 %v60, 64
    %v441 = vpop.permute.xlu0 %440
    %442 = vrot.lane.b32.xlu0 %v61, 64
    %v443 = vpop.permute.xlu0 %442
    %444 = vrot.lane.b32.xlu0 %v62, 64
    %v445 = vpop.permute.xlu0 %444
    %446 = vrot.lane.b32.xlu0 %v63, 64
    %v447 = vpop.permute.xlu0 %446
    %vm452 = vcmask 523264
    %v453 = vsel %vm452, %v419, %v441
    %v454 = vsel %vm452, %v420, %v443
    %v455 = vsel %vm452, %v421, %v445
    %v456 = vsel %vm452, %v422, %v447
    %v457 = vpack.c.bf16 %v454, %v453
    %v458 = vpack.c.bf16 %v433, %v432
    %v459 = vpack.c.bf16 %v456, %v455
    %v460 = vpack.c.bf16 %v435, %v434
    %v461 = vld [vmem:[#allocation5] sm:$0xff]
    %v462 = vld [vmem:[#allocation5 + $0x8] sm:$0xff]
    %v463 = vld [vmem:[#allocation5 + $0x10] sm:$0xff]
    %v464 = vld [vmem:[#allocation5 + $0x18] sm:$0xff]
    %v465 = vld [vmem:[#allocation5 + $0x20] sm:$0xff]
    %v466 = vld [vmem:[#allocation5 + $0x28] sm:$0xff]
    %v467 = vld [vmem:[#allocation5 + $0x30] sm:$0xff]
    %v468 = vld [vmem:[#allocation5 + $0x38] sm:$0xff]
    %v469 = vld [vmem:[#allocation5 + $0x40] sm:$0xff]
    %v470 = vld [vmem:[#allocation5 + $0x48] sm:$0xff]
    %v471 = vld [vmem:[#allocation5 + $0x50] sm:$0xff]
    %v472 = vld [vmem:[#allocation5 + $0x58] sm:$0xff]
    %v473 = vld [vmem:[#allocation5 + $0x60] sm:$0xff]
    %v474 = vld [vmem:[#allocation5 + $0x68] sm:$0xff]
    %v475 = vld [vmem:[#allocation5 + $0x70] sm:$0xff]
    %v476 = vld [vmem:[#allocation5 + $0x78] sm:$0xff]
    %v477 = vld [vmem:[#allocation5 + $0x80] sm:$0xff]
    %v478 = vld [vmem:[#allocation5 + $0x88] sm:$0xff]
    %v479 = vld [vmem:[#allocation5 + $0x90] sm:$0xff]
    %v480 = vld [vmem:[#allocation5 + $0x98] sm:$0xff]
    %v481 = vld [vmem:[#allocation5 + $0xa0] sm:$0xff]
    %v482 = vld [vmem:[#allocation5 + $0xa8] sm:$0xff]
    %v483 = vld [vmem:[#allocation5 + $0xb0] sm:$0xff]
    %v484 = vld [vmem:[#allocation5 + $0xb8] sm:$0xff]
    %v509 = vunpack.c.l.b16 %v461
    %v510 = vunpack.c.h.b16 %v461
    %v511 = vunpack.c.l.b16 %v462
    %v512 = vunpack.c.h.b16 %v462
    %v513 = vunpack.c.l.b16 %v463
    %v514 = vunpack.c.h.b16 %v463
    %v515 = vunpack.c.l.b16 %v464
    %v516 = vunpack.c.h.b16 %v464
    %v517 = vunpack.c.l.b16 %v465
    %v518 = vunpack.c.h.b16 %v465
    %v519 = vunpack.c.l.b16 %v466
    %v520 = vunpack.c.h.b16 %v466
    %v521 = vunpack.c.l.b16 %v467
    %v522 = vunpack.c.h.b16 %v467
    %v523 = vunpack.c.l.b16 %v468
    %v524 = vunpack.c.h.b16 %v468
    %v525 = vunpack.c.l.b16 %v469
    %v526 = vunpack.c.h.b16 %v469
    %v527 = vunpack.c.l.b16 %v470
    %v528 = vunpack.c.h.b16 %v470
    %v529 = vunpack.c.l.b16 %v471
    %v530 = vunpack.c.h.b16 %v471
    %v531 = vunpack.c.l.b16 %v472
    %v532 = vunpack.c.h.b16 %v472
    %v533 = vunpack.c.l.b16 %v473
    %v534 = vunpack.c.h.b16 %v473
    %v535 = vunpack.c.l.b16 %v474
    %v536 = vunpack.c.h.b16 %v474
    %v537 = vunpack.c.l.b16 %v475
    %v538 = vunpack.c.h.b16 %v475
    %v539 = vunpack.c.l.b16 %v476
    %v540 = vunpack.c.h.b16 %v476
    %v541 = vunpack.c.l.b16 %v477
    %v542 = vunpack.c.h.b16 %v477
    %v543 = vunpack.c.l.b16 %v478
    %v544 = vunpack.c.h.b16 %v478
    %v545 = vunpack.c.l.b16 %v479
    %v546 = vunpack.c.h.b16 %v479
    %v547 = vunpack.c.l.b16 %v480
    %v548 = vunpack.c.h.b16 %v480
    %v549 = vunpack.c.l.b16 %v481
    %v550 = vunpack.c.h.b16 %v481
    %v551 = vunpack.c.l.b16 %v482
    %v552 = vunpack.c.h.b16 %v482
    %v553 = vunpack.c.l.b16 %v483
    %v554 = vunpack.c.h.b16 %v483
    %v555 = vunpack.c.l.b16 %v484
    %v556 = vunpack.c.h.b16 %v484
    %v557 = vpack.c.b16 %v511, %v509
    %v558 = vpack.c.b16 %v512, %v510
    %v559 = vpack.c.b16 %v515, %v513
    %v560 = vpack.c.b16 %v516, %v514
    %v561 = vpack.c.b16 %v519, %v517
    %v562 = vpack.c.b16 %v520, %v518
    %v563 = vpack.c.b16 %v523, %v521
    %v564 = vpack.c.b16 %v524, %v522
    %v565 = vpack.c.b16 %v527, %v525
    %v566 = vpack.c.b16 %v528, %v526
    %v567 = vpack.c.b16 %v531, %v529
    %v568 = vpack.c.b16 %v532, %v530
    %v569 = vpack.c.b16 %v535, %v533
    %v570 = vpack.c.b16 %v536, %v534
    %v571 = vpack.c.b16 %v539, %v537
    %v572 = vpack.c.b16 %v540, %v538
    %v573 = vpack.c.b16 %v543, %v541
    %v574 = vpack.c.b16 %v544, %v542
    %v575 = vpack.c.b16 %v547, %v545
    %v576 = vpack.c.b16 %v548, %v546
    %v577 = vpack.c.b16 %v551, %v549
    %v578 = vpack.c.b16 %v552, %v550
    %v579 = vpack.c.b16 %v555, %v553
    %v580 = vpack.c.b16 %v556, %v554
    %v606 = vsel %vm452, %v458, 0
    %v609 = vsel %vm452, %v460, 0
    %611 = vmatprep.subr.bf16.mxu0 %v558
    %612 = vmatpush1.bf16.msra.mxu0 %v557
    %613 = vmatprep.subr.bf16.mxu0 %v560
    %614 = vmatpush1.bf16.msra.mxu0 %v559
    %615 = vmatprep.subr.bf16.mxu0 %v562
    %616 = vmatpush1.bf16.msra.mxu0 %v561
    %617 = vmatprep.subr.bf16.mxu0 %v564
    %618 = vmatpush1.bf16.msra.mxu0 %v563
    %619 = vmatprep.subr.bf16.mxu0 %v566
    %620 = vmatpush1.bf16.msra.mxu0 %v565
    %621 = vmatprep.subr.bf16.mxu0 %v568
    %622 = vmatpush1.bf16.msra.mxu0 %v567
    %623 = vmatprep.subr.bf16.mxu0 %v570
    %624 = vmatpush1.bf16.msra.mxu0 %v569
    %625 = vmatprep.subr.bf16.mxu0 %v572
    %626 = vmatpush1.bf16.msra.mxu0 %v571
    %627 = vmatprep.subr.bf16.mxu0 %v574
    %628 = vmatpush1.bf16.msra.mxu0 %v573
    %629 = vmatprep.subr.bf16.mxu0 %v576
    %630 = vmatpush1.bf16.msra.mxu0 %v575
    %631 = vmatprep.subr.bf16.mxu0 %v578
    %632 = vmatpush1.bf16.msra.mxu0 %v577
    %633 = vmatprep.subr.bf16.mxu0 %v580
    %634 = vmatpush1.bf16.msra.mxu0 %v579
    %635 = vmatprep.subr.bf16.mxu0 0
    %636 = vmatpush1.bf16.msra.mxu0 0
    %637 = vmatprep.subr.bf16.mxu0 0
    %638 = vmatpush1.bf16.msra.mxu0 0
    %639 = vmatprep.subr.bf16.mxu0 0
    %640 = vmatpush1.bf16.msra.mxu0 0
    %641 = vmatprep.subr.bf16.mxu0 0
    %642 = vmatpush1.bf16.msra.mxu0 0
    %643 = vmatprep.mubr.bf16.mxu0 %v606
    %644 = vmatmul.mubr.bf16.gmra.mrb[0].mxu0 %v457
    %v645 = vpop.f32.mrb[0].mxu0
    %v646 = vadd.f32 0.0, %v645
    %v647 = vpop.f32.mrb[0].mxu0
    %v648 = vadd.f32 0.0, %v647
    %v649 = vpop.f32.mrb[0].mxu0
    %v650 = vadd.f32 0.0, %v649
    %v651 = vpop.f32.mrb[0].mxu0
    %v652 = vadd.f32 0.0, %v651
    %653 = vmatprep.mubr.bf16.mxu0 %v609
    %654 = vmatmul.mubr.bf16.gmra.mrb[0].mxu0 %v459
    %v655 = vpop.f32.mrb[0].mxu0
    %v656 = vadd.f32 0.0, %v655
    %v657 = vpop.f32.mrb[0].mxu0
    %v658 = vadd.f32 0.0, %v657
    %v659 = vpop.f32.mrb[0].mxu0
    %v660 = vadd.f32 0.0, %v659
    %v661 = vpop.f32.mrb[0].mxu0
    %v662 = vadd.f32 0.0, %v661
    %663 = vdwg.mxu0
    %v664 = vadd.f32 %v646, %v650
    %v665 = vadd.f32 %v664, %v656
    %v666 = vadd.f32 %v665, %v660
    %v667 = vrot.slane %v666, 4
    %v668 = vadd.f32 %v666, %v667
    %v669 = vrot.slane %v668, 2
    %v670 = vadd.f32 %v668, %v669
    %v671 = vrot.slane %v670, 1
    %v672 = vadd.f32 %v670, %v671
    %v673 = vmul.f32 %v646, %v646
    %v674 = vmul.f32 %v650, %v650
    %v675 = vmul.f32 %v656, %v656
    %v676 = vmul.f32 %v660, %v660
    %v677 = vadd.f32 %v673, %v674
    %v678 = vadd.f32 %v677, %v675
    %v679 = vadd.f32 %v678, %v676
    %v680 = vrot.slane %v679, 4
    %v681 = vadd.f32 %v679, %v680
    %v682 = vrot.slane %v681, 2
    %v683 = vadd.f32 %v681, %v682
    %v684 = vrot.slane %v683, 1
    %v685 = vadd.f32 %v683, %v684
    %vm686 = vcmask 1040384
    %v687 = vsel %vm686, %v672, %v685
    %688 = vmatprep.subr.mxu0 0.0
    %689 = vmatpush1.msra.mxu0 %v379
    %690 = vmatprep.subr.mxu0 0.0
    %691 = vmatpush1.msra.mxu0 %v380
    %692 = vmatprep.subr.mxu0 0.0
    %693 = vmatpush1.msra.mxu0 %v381
    %694 = vmatprep.subr.mxu0 0.0
    %695 = vmatpush1.msra.mxu0 %v382
    %696 = vmatprep.subr.mxu0 0.0
    %697 = vmatpush1.msra.mxu0 %v383
    %698 = vmatprep.subr.mxu0 0.0
    %699 = vmatpush1.msra.mxu0 %v384
    %700 = vmatprep.subr.mxu0 0.0
    %701 = vmatpush1.msra.mxu0 %v385
    %702 = vmatprep.subr.mxu0 0.0
    %703 = vmatpush1.msra.mxu0 %v386
    %704 = vmatprep.subr.mxu0 0.0
    %705 = vmatpush1.msra.mxu0 %v387
    %706 = vmatprep.subr.mxu0 0.0
    %707 = vmatpush1.msra.mxu0 %v388
    %708 = vmatprep.subr.mxu0 0.0
    %709 = vmatpush1.msra.mxu0 %v389
    %710 = vmatprep.subr.mxu0 0.0
    %711 = vmatpush1.msra.mxu0 %v390
    %712 = vmatprep.subr.mxu0 0.0
    %713 = vmatpush1.msra.mxu0 %v391
    %714 = vmatprep.subr.mxu0 0.0
    %715 = vmatpush1.msra.mxu0 %v392
    %716 = vmatprep.subr.mxu0 0.0
    %717 = vmatpush1.msra.mxu0 %v393
    %718 = vmatprep.subr.mxu0 0.0
    %719 = vmatpush1.msra.mxu0 %v394
    %720 = vmatprep.subr.mxu0 0.0
    %721 = vmatpush1.msra.mxu0 0.0
    %722 = vmatprep.subr.mxu0 0.0
    %723 = vmatpush1.msra.mxu0 0.0
    %724 = vmatprep.subr.mxu0 0.0
    %725 = vmatpush1.msra.mxu0 0.0
    %726 = vmatprep.subr.mxu0 0.0
    %727 = vmatpush1.msra.mxu0 0.0
    %728 = vmatprep.subr.mxu0 0.0
    %729 = vmatpush1.msra.mxu0 0.0
    %730 = vmatprep.subr.mxu0 0.0
    %731 = vmatpush1.msra.mxu0 0.0
    %732 = vmatprep.subr.mxu0 0.0
    %733 = vmatpush1.msra.mxu0 0.0
    %734 = vmatprep.subr.mxu0 0.0
    %735 = vmatpush1.msra.mxu0 0.0
    %736 = vmatprep.subr.mxu0 0.0
    %737 = vmatpush1.msra.mxu0 0.0
    %738 = vmatprep.subr.mxu0 0.0
    %739 = vmatpush1.msra.mxu0 0.0
    %740 = vmatprep.subr.mxu0 0.0
    %741 = vmatpush1.msra.mxu0 0.0
    %742 = vmatprep.subr.mxu0 0.0
    %743 = vmatpush1.msra.mxu0 0.0
    %744 = vmatprep.subr.mxu0 0.0
    %745 = vmatpush1.msra.mxu0 0.0
    %746 = vmatprep.subr.mxu0 0.0
    %747 = vmatpush1.msra.mxu0 0.0
    %748 = vmatprep.subr.mxu0 0.0
    %749 = vmatpush1.msra.mxu0 0.0
    %750 = vmatprep.subr.mxu0 0.0
    %751 = vmatpush1.msra.mxu0 0.0
    %752 = vmatprep.mubr.f32.mxu0 0.0
    %753 = vmatmul.mubr.f32.gmra.mrb[0].mxu0 %v687
    %v754 = vpop.f32.mrb[0].mxu0
    %v755 = vadd.f32 0.0, %v754
    %v756 = vpop.f32.mrb[0].mxu0
    %757 = vdwg.mxu0
    %v758 = vld [vmem:[%s3] sm:$0x1]
    %v759 = vld [vmem:[%s3 + $0x1] sm:$0x1]
    %v760 = vmul.f32 %v755, 0.001953125
    %v761 = vmul.f32 %v760, %v760
    %v763 = vrot.slane %v761, 7
    %v765 = vsub.f32 %v760, %v763
    %v766 = vadd.f32 %v765, 1e-05
    %v767 = vrsqrt.pop %v766
    %v769 = vrot.slane %v767, 1
    %v771 = vmul.f32 %v758, %v769
    %v772 = vmul.f32 %v760, %v771
    %v773 = vsub.f32 %v759, %v772
    %v775 = vrot.slane %v773, 7
    %v777 = vsel %vm686, %v771, %v775
    %vm778 = vcmask 64512
    %v780 = vsel %vm778, %v777, 0
    %782 = vmatprep.subr.mxu0 0.0
    %783 = vmatpush1.msra.mxu0 %v409
    %784 = vmatprep.subr.mxu0 0.0
    %785 = vmatpush1.msra.mxu0 0.0
    %786 = vmatprep.subr.mxu0 0.0
    %787 = vmatpush1.msra.mxu0 0.0
    %788 = vmatprep.subr.mxu0 0.0
    %789 = vmatpush1.msra.mxu0 0.0
    %790 = vmatprep.subr.mxu0 0.0
    %791 = vmatpush1.msra.mxu0 0.0
    %792 = vmatprep.subr.mxu0 0.0
    %793 = vmatpush1.msra.mxu0 0.0
    %794 = vmatprep.subr.mxu0 0.0
    %795 = vmatpush1.msra.mxu0 0.0
    %796 = vmatprep.subr.mxu0 0.0
    %797 = vmatpush1.msra.mxu0 0.0
    %798 = vmatprep.subr.mxu0 0.0
    %799 = vmatpush1.msra.mxu0 0.0
    %800 = vmatprep.subr.mxu0 0.0
    %801 = vmatpush1.msra.mxu0 0.0
    %802 = vmatprep.subr.mxu0 0.0
    %803 = vmatpush1.msra.mxu0 0.0
    %804 = vmatprep.subr.mxu0 0.0
    %805 = vmatpush1.msra.mxu0 0.0
    %806 = vmatprep.subr.mxu0 0.0
    %807 = vmatpush1.msra.mxu0 0.0
    %808 = vmatprep.subr.mxu0 0.0
    %809 = vmatpush1.msra.mxu0 0.0
    %810 = vmatprep.subr.mxu0 0.0
    %811 = vmatpush1.msra.mxu0 0.0
    %812 = vmatprep.subr.mxu0 0.0
    %813 = vmatpush1.msra.mxu0 0.0
    %814 = vmatprep.subr.mxu0 0.0
    %815 = vmatpush1.msra.mxu0 0.0
    %816 = vmatprep.subr.mxu0 0.0
    %817 = vmatpush1.msra.mxu0 0.0
    %818 = vmatprep.subr.mxu0 0.0
    %819 = vmatpush1.msra.mxu0 0.0
    %820 = vmatprep.subr.mxu0 0.0
    %821 = vmatpush1.msra.mxu0 0.0
    %822 = vmatprep.subr.mxu0 0.0
    %823 = vmatpush1.msra.mxu0 0.0
    %824 = vmatprep.subr.mxu0 0.0
    %825 = vmatpush1.msra.mxu0 0.0
    %826 = vmatprep.subr.mxu0 0.0
    %827 = vmatpush1.msra.mxu0 0.0
    %828 = vmatprep.subr.mxu0 0.0
    %829 = vmatpush1.msra.mxu0 0.0
    %830 = vmatprep.subr.mxu0 0.0
    %831 = vmatpush1.msra.mxu0 0.0
    %832 = vmatprep.subr.mxu0 0.0
    %833 = vmatpush1.msra.mxu0 0.0
    %834 = vmatprep.subr.mxu0 0.0
    %835 = vmatpush1.msra.mxu0 0.0
    %836 = vmatprep.subr.mxu0 0.0
    %837 = vmatpush1.msra.mxu0 0.0
    %838 = vmatprep.subr.mxu0 0.0
    %839 = vmatpush1.msra.mxu0 0.0
    %840 = vmatprep.subr.mxu0 0.0
    %841 = vmatpush1.msra.mxu0 0.0
    %842 = vmatprep.subr.mxu0 0.0
    %843 = vmatpush1.msra.mxu0 0.0
    %844 = vmatprep.subr.mxu0 0.0
    %845 = vmatpush1.msra.mxu0 0.0
    %846 = vmatprep.mubr.f32.mxu0 0.0
    %847 = vmatmul.mubr.f32.gmra.mrb[0].mxu0 %v780
    %v848 = vpop.f32.mrb[0].mxu0
    %v849 = vadd.f32 0.0, %v848
    %v850 = vpop.f32.mrb[0].mxu0
    %851 = vdwg.mxu0
    %v852 = vlaneseq
    %v853 = vshrl.u32 %v852, 7
    %v854 = vsub.s32 0, %v853
    %v855 = vrot.slane %v849, %v854
    %v856 = vmul.f32 %v646, %v855
    %v857 = vmul.f32 %v650, %v855
    %v858 = vmul.f32 %v656, %v855
    %v859 = vmul.f32 %v660, %v855
    %v860 = vlaneseq
    %v861 = vshrl.u32 %v860, 7
    %v862 = vsub.s32 1, %v861
    %v863 = vrot.slane %v849, %v862
    %v864 = vadd.f32 %v856, %v863
    %v865 = vadd.f32 %v857, %v863
    %v866 = vadd.f32 %v858, %v863
    %v867 = vadd.f32 %v859, %v863
    %v868 = vmax.f32 %v864, 0.0
    %v869 = vmax.f32 %v865, 0.0
    %v870 = vmax.f32 %v866, 0.0
    %v871 = vmax.f32 %v867, 0.0
    %v872 = vrot.slane %v868, 7
    %v873 = vrot.slane %v869, 7
    %v874 = vrot.slane %v870, 7
    %v875 = vrot.slane %v871, 7
    %v876 = vsel %vm414, %v874, %v875
    %v877 = vsel %vm414, %v873, %v874
    %v878 = vsel %vm414, %v872, %v873
    %v879 = vsel %vm414, %v875, %v872
    %v880 = vmul.f32 %v879, %v125
    %v881 = vmul.f32 %v878, %v126
    %v882 = vmul.f32 %v877, %v127
    %v883 = vmul.f32 %v876, %v128
    %v884 = vrot.slane %v868, 1
    %v885 = vrot.slane %v869, 1
    %v886 = vrot.slane %v870, 1
    %v887 = vrot.slane %v871, 1
    %v888 = vsel %vm427, %v886, %v887
    %v889 = vsel %vm427, %v885, %v886
    %v890 = vsel %vm427, %v884, %v885
    %v891 = vsel %vm427, %v887, %v884
    %v892 = vmul.f32 %v890, %v137
    %v893 = vmul.f32 %v889, %v138
    %v894 = vmul.f32 %v888, %v139
    %v895 = vmul.f32 %v891, %v140
    %v896 = vpack.c.bf16 %v881, %v880
    %v897 = vpack.c.bf16 %v869, %v868
    %v898 = vpack.c.bf16 %v893, %v892
    %v899 = vpack.c.bf16 %v883, %v882
    %v900 = vpack.c.bf16 %v871, %v870
    %v901 = vpack.c.bf16 %v895, %v894
    %v902 = vld [vmem:[#allocation7] sm:$0xf]
    %v903 = vld [vmem:[#allocation7 + $0x4] sm:$0xf]
    %v904 = vld [vmem:[#allocation7 + $0x8] sm:$0xf]
    %v905 = vld [vmem:[#allocation7 + $0xc] sm:$0xf]
    %v906 = vld [vmem:[#allocation7 + $0x10] sm:$0xf]
    %v907 = vld [vmem:[#allocation7 + $0x14] sm:$0xf]
    %v908 = vld [vmem:[#allocation7 + $0x18] sm:$0xf]
    %v909 = vld [vmem:[#allocation7 + $0x1c] sm:$0xf]
    %v910 = vld [vmem:[#allocation7 + $0x20] sm:$0xf]
    %v911 = vld [vmem:[#allocation7 + $0x24] sm:$0xf]
    %v912 = vld [vmem:[#allocation7 + $0x28] sm:$0xf]
    %v913 = vld [vmem:[#allocation7 + $0x2c] sm:$0xf]
    %v914 = vld [vmem:[#allocation7 + $0x30] sm:$0xf]
    %v915 = vld [vmem:[#allocation7 + $0x34] sm:$0xf]
    %v916 = vld [vmem:[#allocation7 + $0x38] sm:$0xf]
    %v917 = vld [vmem:[#allocation7 + $0x3c] sm:$0xf]
    %v918 = vld [vmem:[#allocation7 + $0x40] sm:$0xf]
    %v919 = vld [vmem:[#allocation7 + $0x44] sm:$0xf]
    %v920 = vld [vmem:[#allocation7 + $0x48] sm:$0xf]
    %v921 = vld [vmem:[#allocation7 + $0x4c] sm:$0xf]
    %v922 = vld [vmem:[#allocation7 + $0x50] sm:$0xf]
    %v923 = vld [vmem:[#allocation7 + $0x54] sm:$0xf]
    %v924 = vld [vmem:[#allocation7 + $0x58] sm:$0xf]
    %v925 = vld [vmem:[#allocation7 + $0x5c] sm:$0xf]
    %v926 = vld [vmem:[#allocation7 + $0x60] sm:$0xf]
    %v927 = vld [vmem:[#allocation7 + $0x64] sm:$0xf]
    %v928 = vld [vmem:[#allocation7 + $0x68] sm:$0xf]
    %v929 = vld [vmem:[#allocation7 + $0x6c] sm:$0xf]
    %v930 = vld [vmem:[#allocation7 + $0x70] sm:$0xf]
    %v931 = vld [vmem:[#allocation7 + $0x74] sm:$0xf]
    %v932 = vld [vmem:[#allocation7 + $0x78] sm:$0xf]
    %v933 = vld [vmem:[#allocation7 + $0x7c] sm:$0xf]
    %v934 = vld [vmem:[#allocation7 + $0x80] sm:$0xf]
    %v935 = vld [vmem:[#allocation7 + $0x84] sm:$0xf]
    %v936 = vld [vmem:[#allocation7 + $0x88] sm:$0xf]
    %v937 = vld [vmem:[#allocation7 + $0x8c] sm:$0xf]
    %v938 = vld [vmem:[#allocation7 + $0x90] sm:$0xf]
    %v939 = vld [vmem:[#allocation7 + $0x94] sm:$0xf]
    %v940 = vld [vmem:[#allocation7 + $0x98] sm:$0xf]
    %v941 = vld [vmem:[#allocation7 + $0x9c] sm:$0xf]
    %v942 = vld [vmem:[#allocation7 + $0xa0] sm:$0xf]
    %v943 = vld [vmem:[#allocation7 + $0xa4] sm:$0xf]
    %v944 = vld [vmem:[#allocation7 + $0xa8] sm:$0xf]
    %v945 = vld [vmem:[#allocation7 + $0xac] sm:$0xf]
    %v946 = vld [vmem:[#allocation7 + $0xb0] sm:$0xf]
    %v947 = vld [vmem:[#allocation7 + $0xb4] sm:$0xf]
    %v948 = vld [vmem:[#allocation7 + $0xb8] sm:$0xf]
    %v949 = vld [vmem:[#allocation7 + $0xbc] sm:$0xf]
    %v998 = vunpack.c.l.b16 %v902
    %v999 = vunpack.c.l.b16 %v903
    %v1000 = vunpack.c.l.b16 %v904
    %v1001 = vunpack.c.l.b16 %v905
    %v1002 = vunpack.c.l.b16 %v906
    %v1003 = vunpack.c.l.b16 %v907
    %v1004 = vunpack.c.l.b16 %v908
    %v1005 = vunpack.c.l.b16 %v909
    %v1006 = vunpack.c.l.b16 %v910
    %v1007 = vunpack.c.l.b16 %v911
    %v1008 = vunpack.c.l.b16 %v912
    %v1009 = vunpack.c.l.b16 %v913
    %v1010 = vunpack.c.l.b16 %v914
    %v1011 = vunpack.c.l.b16 %v915
    %v1012 = vunpack.c.l.b16 %v916
    %v1013 = vunpack.c.l.b16 %v917
    %v1014 = vunpack.c.l.b16 %v918
    %v1015 = vunpack.c.l.b16 %v919
    %v1016 = vunpack.c.l.b16 %v920
    %v1017 = vunpack.c.l.b16 %v921
    %v1018 = vunpack.c.l.b16 %v922
    %v1019 = vunpack.c.l.b16 %v923
    %v1020 = vunpack.c.l.b16 %v924
    %v1021 = vunpack.c.l.b16 %v925
    %v1022 = vunpack.c.l.b16 %v926
    %v1023 = vunpack.c.l.b16 %v927
    %v1024 = vunpack.c.l.b16 %v928
    %v1025 = vunpack.c.l.b16 %v929
    %v1026 = vunpack.c.l.b16 %v930
    %v1027 = vunpack.c.l.b16 %v931
    %v1028 = vunpack.c.l.b16 %v932
    %v1029 = vunpack.c.l.b16 %v933
    %v1030 = vunpack.c.l.b16 %v934
    %v1031 = vunpack.c.l.b16 %v935
    %v1032 = vunpack.c.l.b16 %v936
    %v1033 = vunpack.c.l.b16 %v937
    %v1034 = vunpack.c.l.b16 %v938
    %v1035 = vunpack.c.l.b16 %v939
    %v1036 = vunpack.c.l.b16 %v940
    %v1037 = vunpack.c.l.b16 %v941
    %v1038 = vunpack.c.l.b16 %v942
    %v1039 = vunpack.c.l.b16 %v943
    %v1040 = vunpack.c.l.b16 %v944
    %v1041 = vunpack.c.l.b16 %v945
    %v1042 = vunpack.c.l.b16 %v946
    %v1043 = vunpack.c.l.b16 %v947
    %v1044 = vunpack.c.l.b16 %v948
    %v1045 = vunpack.c.l.b16 %v949
    %v1046 = vpack.c.b16 %v999, %v998
    %v1047 = vpack.c.b16 %v1001, %v1000
    %v1048 = vpack.c.b16 %v1003, %v1002
    %v1049 = vpack.c.b16 %v1005, %v1004
    %v1050 = vpack.c.b16 %v1007, %v1006
    %v1051 = vpack.c.b16 %v1009, %v1008
    %v1052 = vpack.c.b16 %v1011, %v1010
    %v1053 = vpack.c.b16 %v1013, %v1012
    %v1054 = vpack.c.b16 %v1015, %v1014
    %v1055 = vpack.c.b16 %v1017, %v1016
    %v1056 = vpack.c.b16 %v1019, %v1018
    %v1057 = vpack.c.b16 %v1021, %v1020
    %v1058 = vpack.c.b16 %v1023, %v1022
    %v1059 = vpack.c.b16 %v1025, %v1024
    %v1060 = vpack.c.b16 %v1027, %v1026
    %v1061 = vpack.c.b16 %v1029, %v1028
    %v1062 = vpack.c.b16 %v1031, %v1030
    %v1063 = vpack.c.b16 %v1033, %v1032
    %v1064 = vpack.c.b16 %v1035, %v1034
    %v1065 = vpack.c.b16 %v1037, %v1036
    %v1066 = vpack.c.b16 %v1039, %v1038
    %v1067 = vpack.c.b16 %v1041, %v1040
    %v1068 = vpack.c.b16 %v1043, %v1042
    %v1069 = vpack.c.b16 %v1045, %v1044
    %1094 = vmatprep.subr.bf16.mxu0 0
    %1095 = vmatpush1.bf16.msra.mxu0 %v1046
    %1096 = vmatprep.subr.bf16.mxu0 0
    %1097 = vmatpush1.bf16.msra.mxu0 %v1047
    %1098 = vmatprep.subr.bf16.mxu0 0
    %1099 = vmatpush1.bf16.msra.mxu0 %v1048
    %1100 = vmatprep.subr.bf16.mxu0 0
    %1101 = vmatpush1.bf16.msra.mxu0 %v1049
    %1102 = vmatprep.subr.bf16.mxu0 0
    %1103 = vmatpush1.bf16.msra.mxu0 %v1050
    %1104 = vmatprep.subr.bf16.mxu0 0
    %1105 = vmatpush1.bf16.msra.mxu0 %v1051
    %1106 = vmatprep.subr.bf16.mxu0 0
    %1107 = vmatpush1.bf16.msra.mxu0 %v1052
    %1108 = vmatprep.subr.bf16.mxu0 0
    %1109 = vmatpush1.bf16.msra.mxu0 %v1053
    %1110 = vmatprep.subr.bf16.mxu0 0
    %1111 = vmatpush1.bf16.msra.mxu0 %v1054
    %1112 = vmatprep.subr.bf16.mxu0 0
    %1113 = vmatpush1.bf16.msra.mxu0 %v1055
    %1114 = vmatprep.subr.bf16.mxu0 0
    %1115 = vmatpush1.bf16.msra.mxu0 %v1056
    %1116 = vmatprep.subr.bf16.mxu0 0
    %1117 = vmatpush1.bf16.msra.mxu0 %v1057
    %1118 = vmatprep.subr.bf16.mxu0 0
    %1119 = vmatpush1.bf16.msra.mxu0 %v1058
    %1120 = vmatprep.subr.bf16.mxu0 0
    %1121 = vmatpush1.bf16.msra.mxu0 %v1059
    %1122 = vmatprep.subr.bf16.mxu0 0
    %1123 = vmatpush1.bf16.msra.mxu0 %v1060
    %1124 = vmatprep.subr.bf16.mxu0 0
    %1125 = vmatpush1.bf16.msra.mxu0 %v1061
    %1126 = vmatprep.mubr.bf16.mxu0 %v897
    %1127 = vmatmul.mubr.bf16.gmra.mrb[0].mxu0 %v896
    %v1128 = vpop.f32.mrb[0].mxu0
    %v1129 = vadd.f32 0.0, %v1128
    %v1130 = vpop.f32.mrb[0].mxu0
    %v1131 = vpop.f32.mrb[0].mxu0
    %v1132 = vadd.f32 0.0, %v1131
    %v1133 = vpop.f32.mrb[0].mxu0
    %1134 = vmatprep.mubr.bf16.mxu0 %v900
    %1135 = vmatmul.mubr.bf16.gmra.mrb[0].mxu0 %v899
    %v1136 = vpop.f32.mrb[0].mxu0
    %v1137 = vadd.f32 0.0, %v1136
    %v1138 = vpop.f32.mrb[0].mxu0
    %v1139 = vpop.f32.mrb[0].mxu0
    %v1140 = vadd.f32 0.0, %v1139
    %v1141 = vpop.f32.mrb[0].mxu0
    %1142 = vdwg.mxu0
    %1143 = vmatprep.subr.bf16.mxu0 0
    %1144 = vmatpush1.bf16.msra.mxu0 %v1062
    %1145 = vmatprep.subr.bf16.mxu0 0
    %1146 = vmatpush1.bf16.msra.mxu0 %v1063
    %1147 = vmatprep.subr.bf16.mxu0 0
    %1148 = vmatpush1.bf16.msra.mxu0 %v1064
    %1149 = vmatprep.subr.bf16.mxu0 0
    %1150 = vmatpush1.bf16.msra.mxu0 %v1065
    %1151 = vmatprep.subr.bf16.mxu0 0
    %1152 = vmatpush1.bf16.msra.mxu0 %v1066
    %1153 = vmatprep.subr.bf16.mxu0 0
    %1154 = vmatpush1.bf16.msra.mxu0 %v1067
    %1155 = vmatprep.subr.bf16.mxu0 0
    %1156 = vmatpush1.bf16.msra.mxu0 %v1068
    %1157 = vmatprep.subr.bf16.mxu0 0
    %1158 = vmatpush1.bf16.msra.mxu0 %v1069
    %1159 = vmatprep.subr.bf16.mxu0 0
    %1160 = vmatpush1.bf16.msra.mxu0 0
    %1161 = vmatprep.subr.bf16.mxu0 0
    %1162 = vmatpush1.bf16.msra.mxu0 0
    %1163 = vmatprep.subr.bf16.mxu0 0
    %1164 = vmatpush1.bf16.msra.mxu0 0
    %1165 = vmatprep.subr.bf16.mxu0 0
    %1166 = vmatpush1.bf16.msra.mxu0 0
    %1167 = vmatprep.subr.bf16.mxu0 0
    %1168 = vmatpush1.bf16.msra.mxu0 0
    %1169 = vmatprep.subr.bf16.mxu0 0
    %1170 = vmatpush1.bf16.msra.mxu0 0
    %1171 = vmatprep.subr.bf16.mxu0 0
    %1172 = vmatpush1.bf16.msra.mxu0 0
    %1173 = vmatprep.subr.bf16.mxu0 0
    %1174 = vmatpush1.bf16.msra.mxu0 0
    %1175 = vmatprep.mubr.bf16.mxu0 0
    %1176 = vmatmul.mubr.bf16.gmra.mrb[0].mxu0 %v898
    %v1177 = vpop.f32.mrb[0].mxu0
    %v1178 = vadd.f32 %v1129, %v1177
    %v1179 = vpop.f32.mrb[0].mxu0
    %v1180 = vpop.f32.mrb[0].mxu0
    %v1181 = vadd.f32 %v1132, %v1180
    %v1182 = vpop.f32.mrb[0].mxu0
    %1183 = vmatprep.mubr.bf16.mxu0 0
    %1184 = vmatmul.mubr.bf16.gmra.mrb[0].mxu0 %v901
    %v1185 = vpop.f32.mrb[0].mxu0
    %v1186 = vadd.f32 %v1137, %v1185
    %v1187 = vpop.f32.mrb[0].mxu0
    %v1188 = vpop.f32.mrb[0].mxu0
    %v1189 = vadd.f32 %v1140, %v1188
    %v1190 = vpop.f32.mrb[0].mxu0
    %1191 = vdwg.mxu0
    %v1192 = vadd.f32 %v1178, %v1181
    %v1193 = vadd.f32 %v1192, %v1186
    %v1194 = vadd.f32 %v1193, %v1189
    %v1195 = vrot.slane %v1194, 4
    %v1196 = vadd.f32 %v1194, %v1195
    %v1197 = vrot.slane %v1196, 2
    %v1198 = vadd.f32 %v1196, %v1197
    %v1199 = vrot.slane %v1198, 1
    %v1200 = vadd.f32 %v1198, %v1199
    %v1201 = vmul.f32 %v1178, %v1178
    %v1202 = vmul.f32 %v1181, %v1181
    %v1203 = vmul.f32 %v1186, %v1186
    %v1204 = vmul.f32 %v1189, %v1189
    %v1205 = vadd.f32 %v1201, %v1202
    %v1206 = vadd.f32 %v1205, %v1203
    %v1207 = vadd.f32 %v1206, %v1204
    %v1208 = vrot.slane %v1207, 4
    %v1209 = vadd.f32 %v1207, %v1208
    %v1210 = vrot.slane %v1209, 2
    %v1211 = vadd.f32 %v1209, %v1210
    %v1212 = vrot.slane %v1211, 1
    %v1213 = vadd.f32 %v1211, %v1212
    %v1214 = vsel %vm686, %v1200, %v1213
    %v1215 = vadd.f32 %v648, %v652
    %v1216 = vadd.f32 %v1215, %v658
    %v1217 = vadd.f32 %v1216, %v662
    %v1218 = vrot.slane %v1217, 4
    %v1219 = vadd.f32 %v1217, %v1218
    %v1220 = vrot.slane %v1219, 2
    %v1221 = vadd.f32 %v1219, %v1220
    %v1222 = vrot.slane %v1221, 1
    %v1223 = vadd.f32 %v1221, %v1222
    %v1224 = vmul.f32 %v648, %v648
    %v1225 = vmul.f32 %v652, %v652
    %v1226 = vmul.f32 %v658, %v658
    %v1227 = vmul.f32 %v662, %v662
    %v1228 = vadd.f32 %v1224, %v1225
    %v1229 = vadd.f32 %v1228, %v1226
    %v1230 = vadd.f32 %v1229, %v1227
    %v1231 = vrot.slane %v1230, 4
    %v1232 = vadd.f32 %v1230, %v1231
    %v1233 = vrot.slane %v1232, 2
    %v1234 = vadd.f32 %v1232, %v1233
    %v1235 = vrot.slane %v1234, 1
    %v1236 = vadd.f32 %v1234, %v1235
    %v1237 = vsel %vm686, %v1223, %v1236
    %v1239 = vrot.slane %v1237, 6
    %vm1241 = vcmask 1041408
    %v1242 = vsel %vm1241, %v1214, %v1239
    %1243 = vmatprep.subr.mxu0 0.0
    %1244 = vmatpush1.msra.mxu0 %v379
    %1245 = vmatprep.subr.mxu0 0.0
    %1246 = vmatpush1.msra.mxu0 %v380
    %1247 = vmatprep.subr.mxu0 0.0
    %1248 = vmatpush1.msra.mxu0 %v381
    %1249 = vmatprep.subr.mxu0 0.0
    %1250 = vmatpush1.msra.mxu0 %v382
    %1251 = vmatprep.subr.mxu0 0.0
    %1252 = vmatpush1.msra.mxu0 %v383
    %1253 = vmatprep.subr.mxu0 0.0
    %1254 = vmatpush1.msra.mxu0 %v384
    %1255 = vmatprep.subr.mxu0 0.0
    %1256 = vmatpush1.msra.mxu0 %v385
    %1257 = vmatprep.subr.mxu0 0.0
    %1258 = vmatpush1.msra.mxu0 %v386
    %1259 = vmatprep.subr.mxu0 0.0
    %1260 = vmatpush1.msra.mxu0 %v387
    %1261 = vmatprep.subr.mxu0 0.0
    %1262 = vmatpush1.msra.mxu0 %v388
    %1263 = vmatprep.subr.mxu0 0.0
    %1264 = vmatpush1.msra.mxu0 %v389
    %1265 = vmatprep.subr.mxu0 0.0
    %1266 = vmatpush1.msra.mxu0 %v390
    %1267 = vmatprep.subr.mxu0 0.0
    %1268 = vmatpush1.msra.mxu0 %v391
    %1269 = vmatprep.subr.mxu0 0.0
    %1270 = vmatpush1.msra.mxu0 %v392
    %1271 = vmatprep.subr.mxu0 0.0
    %1272 = vmatpush1.msra.mxu0 %v393
    %1273 = vmatprep.subr.mxu0 0.0
    %1274 = vmatpush1.msra.mxu0 %v394
    %1275 = vmatprep.subr.mxu0 0.0
    %1276 = vmatpush1.msra.mxu0 0.0
    %1277 = vmatprep.subr.mxu0 0.0
    %1278 = vmatpush1.msra.mxu0 0.0
    %1279 = vmatprep.subr.mxu0 0.0
    %1280 = vmatpush1.msra.mxu0 0.0
    %1281 = vmatprep.subr.mxu0 0.0
    %1282 = vmatpush1.msra.mxu0 0.0
    %1283 = vmatprep.subr.mxu0 0.0
    %1284 = vmatpush1.msra.mxu0 0.0
    %1285 = vmatprep.subr.mxu0 0.0
    %1286 = vmatpush1.msra.mxu0 0.0
    %1287 = vmatprep.subr.mxu0 0.0
    %1288 = vmatpush1.msra.mxu0 0.0
    %1289 = vmatprep.subr.mxu0 0.0
    %1290 = vmatpush1.msra.mxu0 0.0
    %1291 = vmatprep.subr.mxu0 0.0
    %1292 = vmatpush1.msra.mxu0 0.0
    %1293 = vmatprep.subr.mxu0 0.0
    %1294 = vmatpush1.msra.mxu0 0.0
    %1295 = vmatprep.subr.mxu0 0.0
    %1296 = vmatpush1.msra.mxu0 0.0
    %1297 = vmatprep.subr.mxu0 0.0
    %1298 = vmatpush1.msra.mxu0 0.0
    %1299 = vmatprep.subr.mxu0 0.0
    %1300 = vmatpush1.msra.mxu0 0.0
    %1301 = vmatprep.subr.mxu0 0.0
    %1302 = vmatpush1.msra.mxu0 0.0
    %1303 = vmatprep.subr.mxu0 0.0
    %1304 = vmatpush1.msra.mxu0 0.0
    %1305 = vmatprep.subr.mxu0 0.0
    %1306 = vmatpush1.msra.mxu0 0.0
    %1307 = vmatprep.mubr.f32.mxu0 0.0
    %1308 = vmatmul.mubr.f32.gmra.mrb[0].mxu0 %v1242
    %v1309 = vpop.f32.mrb[0].mxu0
    %v1310 = vadd.f32 0.0, %v1309
    %v1311 = vpop.f32.mrb[0].mxu0
    %1312 = vdwg.mxu0
    %v1313 = vld [vmem:[%s3 + $0x2] sm:$0x1]
    %v1314 = vld [vmem:[%s3 + $0x3] sm:$0x1]
    %v1315 = vmul.f32 %v1310, 0.001953125
    %v1316 = vmul.f32 %v1315, %v1315
    %v1318 = vrot.slane %v1316, 7
    %v1320 = vsub.f32 %v1315, %v1318
    %v1321 = vadd.f32 %v1320, 1e-05
    %v1322 = vrsqrt.pop %v1321
    %v1324 = vrot.slane %v1322, 1
    %v1326 = vmul.f32 %v1313, %v1324
    %v1327 = vmul.f32 %v1315, %v1326
    %v1328 = vsub.f32 %v1314, %v1327
    %v1329 = vld [vmem:[%s3 + $0x4] sm:$0x1]
    %v1330 = vld [vmem:[%s3 + $0x5] sm:$0x1]
    %v1331 = vrot.slane %v1322, 3
    %v1333 = vmul.f32 %v1329, %v1331
    %v1335 = vrot.slane %v1333, 6
    %v1337 = vmul.f32 %v1315, %v1335
    %v1339 = vrot.slane %v1337, 2
    %v1341 = vsub.f32 %v1330, %v1339
    %v1343 = vrot.slane %v1328, 7
    %v1346 = vrot.slane %v1341, 5
    %v1348 = vsel %vm686, %v1326, %v1343
    %v1349 = vsel %vm1241, %v1348, %v1335
    %vm1350 = vcmask 1042432
    %v1351 = vsel %vm1350, %v1349, %v1346
    %v1353 = vsel %vm778, %v1351, 0
    %1355 = vmatprep.subr.mxu0 0.0
    %1356 = vmatpush1.msra.mxu0 %v409
    %1357 = vmatprep.subr.mxu0 0.0
    %1358 = vmatpush1.msra.mxu0 0.0
    %1359 = vmatprep.subr.mxu0 0.0
    %1360 = vmatpush1.msra.mxu0 0.0
    %1361 = vmatprep.subr.mxu0 0.0
    %1362 = vmatpush1.msra.mxu0 0.0
    %1363 = vmatprep.subr.mxu0 0.0
    %1364 = vmatpush1.msra.mxu0 0.0
    %1365 = vmatprep.subr.mxu0 0.0
    %1366 = vmatpush1.msra.mxu0 0.0
    %1367 = vmatprep.subr.mxu0 0.0
    %1368 = vmatpush1.msra.mxu0 0.0
    %1369 = vmatprep.subr.mxu0 0.0
    %1370 = vmatpush1.msra.mxu0 0.0
    %1371 = vmatprep.subr.mxu0 0.0
    %1372 = vmatpush1.msra.mxu0 0.0
    %1373 = vmatprep.subr.mxu0 0.0
    %1374 = vmatpush1.msra.mxu0 0.0
    %1375 = vmatprep.subr.mxu0 0.0
    %1376 = vmatpush1.msra.mxu0 0.0
    %1377 = vmatprep.subr.mxu0 0.0
    %1378 = vmatpush1.msra.mxu0 0.0
    %1379 = vmatprep.subr.mxu0 0.0
    %1380 = vmatpush1.msra.mxu0 0.0
    %1381 = vmatprep.subr.mxu0 0.0
    %1382 = vmatpush1.msra.mxu0 0.0
    %1383 = vmatprep.subr.mxu0 0.0
    %1384 = vmatpush1.msra.mxu0 0.0
    %1385 = vmatprep.subr.mxu0 0.0
    %1386 = vmatpush1.msra.mxu0 0.0
    %1387 = vmatprep.subr.mxu0 0.0
    %1388 = vmatpush1.msra.mxu0 0.0
    %1389 = vmatprep.subr.mxu0 0.0
    %1390 = vmatpush1.msra.mxu0 0.0
    %1391 = vmatprep.subr.mxu0 0.0
    %1392 = vmatpush1.msra.mxu0 0.0
    %1393 = vmatprep.subr.mxu0 0.0
    %1394 = vmatpush1.msra.mxu0 0.0
    %1395 = vmatprep.subr.mxu0 0.0
    %1396 = vmatpush1.msra.mxu0 0.0
    %1397 = vmatprep.subr.mxu0 0.0
    %1398 = vmatpush1.msra.mxu0 0.0
    %1399 = vmatprep.subr.mxu0 0.0
    %1400 = vmatpush1.msra.mxu0 0.0
    %1401 = vmatprep.subr.mxu0 0.0
    %1402 = vmatpush1.msra.mxu0 0.0
    %1403 = vmatprep.subr.mxu0 0.0
    %1404 = vmatpush1.msra.mxu0 0.0
    %1405 = vmatprep.subr.mxu0 0.0
    %1406 = vmatpush1.msra.mxu0 0.0
    %1407 = vmatprep.subr.mxu0 0.0
    %1408 = vmatpush1.msra.mxu0 0.0
    %1409 = vmatprep.subr.mxu0 0.0
    %1410 = vmatpush1.msra.mxu0 0.0
    %1411 = vmatprep.subr.mxu0 0.0
    %1412 = vmatpush1.msra.mxu0 0.0
    %1413 = vmatprep.subr.mxu0 0.0
    %1414 = vmatpush1.msra.mxu0 0.0
    %1415 = vmatprep.subr.mxu0 0.0
    %1416 = vmatpush1.msra.mxu0 0.0
    %1417 = vmatprep.subr.mxu0 0.0
    %1418 = vmatpush1.msra.mxu0 0.0
    %1419 = vmatprep.mubr.f32.mxu0 0.0
    %1420 = vmatmul.mubr.f32.gmra.mrb[0].mxu0 %v1353
    %v1421 = vpop.f32.mrb[0].mxu0
    %v1422 = vadd.f32 0.0, %v1421
    %v1423 = vpop.f32.mrb[0].mxu0
    %1424 = vdwg.mxu0
    %v1425 = vlaneseq
    %v1426 = vshrl.u32 %v1425, 7
    %v1427 = vsub.s32 0, %v1426
    %v1428 = vrot.slane %v1422, %v1427
    %v1429 = vmul.f32 %v1178, %v1428
    %v1430 = vmul.f32 %v1181, %v1428
    %v1431 = vmul.f32 %v1186, %v1428
    %v1432 = vmul.f32 %v1189, %v1428
    %v1433 = vlaneseq
    %v1434 = vshrl.u32 %v1433, 7
    %v1435 = vsub.s32 1, %v1434
    %v1436 = vrot.slane %v1422, %v1435
    %v1437 = vadd.f32 %v1429, %v1436
    %v1438 = vadd.f32 %v1430, %v1436
    %v1439 = vadd.f32 %v1431, %v1436
    %v1440 = vadd.f32 %v1432, %v1436
    %v1441 = vlaneseq
    %v1442 = vshrl.u32 %v1441, 7
    %v1443 = vsub.s32 2, %v1442
    %v1444 = vrot.slane %v1422, %v1443
    %v1445 = vmul.f32 %v648, %v1444
    %v1446 = vmul.f32 %v652, %v1444
    %v1447 = vmul.f32 %v658, %v1444
    %v1448 = vmul.f32 %v662, %v1444
    %v1449 = vadd.f32 %v1437, %v1445
    %v1450 = vadd.f32 %v1438, %v1446
    %v1451 = vadd.f32 %v1439, %v1447
    %v1452 = vadd.f32 %v1440, %v1448
    %v1453 = vlaneseq
    %v1454 = vshrl.u32 %v1453, 7
    %v1455 = vsub.s32 3, %v1454
    %v1456 = vrot.slane %v1422, %v1455
    %v1457 = vadd.f32 %v1449, %v1456
    %v1458 = vadd.f32 %v1450, %v1456
    %v1459 = vadd.f32 %v1451, %v1456
    %v1460 = vadd.f32 %v1452, %v1456
    %v1461 = vmax.f32 %v1457, 0.0
    %v1462 = vmax.f32 %v1458, 0.0
    %v1463 = vmax.f32 %v1459, 0.0
    %v1464 = vmax.f32 %v1460, 0.0
    %1465 = vst [vmem:[#allocation8] sm:$0xff] %v1461
    %1466 = vst [vmem:[#allocation8 + $0x8] sm:$0xff] %v1462
    %1467 = vst [vmem:[#allocation8 + $0x10] sm:$0xff] %v1463
    %1468 = vst [vmem:[#allocation8 + $0x18] sm:$0xff] %v1464
    // Predicated region
    $region30: #{tpu_custom_call.1} parent=1 // pred_check
      _
    $region31: #{tpu_custom_call.1} parent=1 // pred_check_branch
      %1470 = sbr.rel (0) target = $region33
    $region32: #{tpu_custom_call.1} parent=1 // pred_region
      %s1472 = ssub.s32 512, 512
      %1473 = vsyncadd [#allocation4], %s1472
      %s1474 = sshll.u32 [#allocation8], 4
      %s1475 = int_to_ptr.vmem [resolvable:$true] %s1474
      %1480 = dma.vmem_to_hbm [thread:$0]  %s1475, 512, %s4, [#allocation4], 128, 128, 8
    $region33: #{tpu_custom_call.1} parent=1 // pred_fallthru
      _
    // Predicated region
    $region34: #{tpu_custom_call.1} parent=1 // pred_check
      _
    $region35: #{tpu_custom_call.1} parent=1 // pred_check_branch
      %1482 = sbr.rel (0) target = $region37
    $region36: #{tpu_custom_call.1} parent=1 // pred_region
      %1483 = dma.done [#allocation4], 512
    $region37: #{tpu_custom_call.1} parent=1 // pred_fallthru
      _
    %1484 = vsyncpa [#allocation3], 1
    %1485 = vsyncpa [#allocation6], 1
    %1486 = vsyncpa [#allocation4], 1

</llo_original>
